<compile_context>
chip_gen: v6e
topology: v6e:2x2x1
jax: 0.10.0
libtpu: 0.0.40
codegen_flags: <defaults>
</compile_context>

<pallas_src>
import jax
import jax.numpy as jnp
from jax.experimental import pallas as pl
from jax.experimental.pallas import tpu as pltpu


def mlp_kernel(x_ref, w1_ref, w2_ref, w3t_ref, b_ref, o_ref):
    x = x_ref[...]                                   # [TB, D] f32 (native dtype)
    b = b_ref[...]                                   # [32, 1] packed biases
    b1 = b[0:10]                                     # sublane offsets 0 / 16 / 24
    b2 = b[16:21]                                    # are 8-aligned
    b3 = b[24:25]

    # Layer 1: W1 [10, D] x [TB, D] -> [10, TB] (contract both minor dims,
    # q @ k.T pattern), putting the batch on lanes for the rest of the net.
    h1 = jax.lax.dot_general(
        w1_ref[...], x, (((1,), (1,)), ((), ())),
        precision=jax.lax.Precision.HIGHEST,
        preferred_element_type=jnp.float32)          # [10, TB]
    h1 = jnp.maximum(h1 + b1, 0.0)

    # Layer 2: [5, 10] @ [10, TB] -> [5, TB]; batch stays on lanes.
    h2 = jnp.dot(w2_ref[...], h1,
                 precision=jax.lax.Precision.HIGHEST,
                 preferred_element_type=jnp.float32)
    h2 = jnp.maximum(h2 + b2, 0.0)

    # Layer 3: [1,5] @ [5,TB] as a VPU broadcast-FMA + sublane reduce
    # (skips one MXU push/pop through the result FIFO for this tiny row).
    z = jnp.sum(w3t_ref[...] * h2, axis=0, keepdims=True) + b3      # [1, TB]
    o_ref[...] = jax.nn.sigmoid(z)                   # lane-dense [1, TB] store


def _pick_tile_b(batch, max_tile=8192):
    """Largest multiple-of-128 tile dividing the batch, capped so that
    (a) the double-buffered, lane-padded x tile stays well inside scoped VMEM
        on every generation (8192 rows ~= 8 MiB), and
    (b) the grid has >= 2 steps whenever the batch allows it (keeps both v7x
        TensorCores busy).  Batches not divisible by 128 fall back to a
        single full-batch tile instead of being rejected."""
    if batch % 128 != 0:
        return batch
    cap = min(max_tile, batch // 2 if batch >= 256 else batch)
    cap = (cap // 128) * 128
    if cap < 128:
        return batch
    t = cap
    while t >= 128:
        if batch % t == 0:
            return t
        t -= 128
    return batch


def binary_classifier_forward(x, params, *, tile_b=None):
    """x: [B, input_dim] -> [B, 1] sigmoid probabilities (float32)."""
    w1, b1, w2, b2, w3, b3 = params  # PyTorch layout: w [out, in], b [out, 1]
    B, D = x.shape
    H1, H2, O = w1.shape[0], w2.shape[0], w3.shape[0]

    if tile_b is None:
        tile_b = _pick_tile_b(B)
    assert B % tile_b == 0, "batch must be divisible by tile_b"
    assert tile_b == B or tile_b % 128 == 0, \
        "tile_b must equal the batch size or be a multiple of 128"
    grid = (B // tile_b,)

    # Pack the three bias columns into a single sublane-aligned (32, 1)
    # operand: b1 -> rows 0..9, b2 -> rows 16..20, b3 -> row 24.
    pad_rows = lambda a, rows: jnp.pad(a, ((0, rows - a.shape[0]), (0, 0)))
    b_all = jnp.concatenate(
        [pad_rows(b1, 16), pad_rows(b2, 8), pad_rows(b3, 8)], axis=0)  # (32, 1)

    rep2 = lambda shape: pl.BlockSpec(shape, lambda i: (0, 0))  # broadcast block

    out = pl.pallas_call(
        mlp_kernel,
        out_shape=jax.ShapeDtypeStruct((1, B), jnp.float32),    # lane-dense output
        grid_spec=pltpu.PrefetchScalarGridSpec(
            num_scalar_prefetch=0,
            grid=grid,
            in_specs=[
                pl.BlockSpec((tile_b, D), lambda i: (i, 0)),    # x batch tile (f32)
                rep2((H1, D)),                                  # W1
                rep2((H2, H1)),                                 # W2
                rep2((H2, O)),                                  # W3^T (5, 1)
                rep2((32, 1)),                                  # packed biases
            ],
            out_specs=pl.BlockSpec((1, tile_b), lambda i: (0, i)),
        ),
        compiler_params=pltpu.CompilerParams(
            dimension_semantics=("parallel",),
            vmem_limit_bytes=32 * 1024 * 1024,  # covers tile_b=8192 on v5e too
        ),
    )(x, w1, w2, w3.T, b_all)

    return out.reshape(B, 1)


def init_params(key, input_dim):
    """Deterministic init matching nn.Linear (weights kept as [out, in])."""
    dims = [(input_dim, 10), (10, 5), (5, 1)]
    params = []
    for fan_in, fan_out in dims:
        kw, kb, key = jax.random.split(key, 3)
        bound = 1.0 / jnp.sqrt(fan_in)
        w = jax.random.uniform(kw, (fan_out, fan_in), jnp.float32, -bound, bound)
        b = jax.random.uniform(kb, (fan_out, 1), jnp.float32, -bound, bound)
        params += [w, b]
    return tuple(params)


def reference_forward(x, params):
    w1, b1, w2, b2, w3, b3 = params
    h1 = jnp.maximum(x @ w1.T + b1.T, 0.0)
    h2 = jnp.maximum(h1 @ w2.T + b2.T, 0.0)
    return jax.nn.sigmoid(h2 @ w3.T + b3.T)


if __name__ == "__main__":
    key = jax.random.PRNGKey(0)
    kx, kp = jax.random.split(key)

    batch = 256
    input_dim = 32
    x = jax.random.normal(kx, (batch, input_dim), dtype=jnp.float32)
    params = init_params(kp, input_dim)

    # auto tile: 128 rows -> 2 "parallel" grid steps (pipelined DMA, both TCs on v7x)
    out = binary_classifier_forward(x, params)
    out = jax.block_until_ready(out)

    ref = reference_forward(x, params)
    assert out.shape == (batch, 1)
    # All-f32 path (HIGHEST precision on the MXU) -> tight tolerance.
    assert jnp.allclose(out, ref, atol=1e-3, rtol=0.0), \
        float(jnp.max(jnp.abs(out - ref)))

    print("KERNEL_OK")
</pallas_src>

<mosaic_0001>
module attributes {stable_mosaic.version = 11 : i64} {
  func.func @mlp_kernel(%arg0: i32, %arg1: memref<128x32xf32, #tpu.memory_space<vmem>>, %arg2: memref<10x32xf32, #tpu.memory_space<vmem>>, %arg3: memref<5x10xf32, #tpu.memory_space<vmem>>, %arg4: memref<5x1xf32, #tpu.memory_space<vmem>>, %arg5: memref<32x1xf32, #tpu.memory_space<vmem>>, %arg6: memref<1x128xf32, #tpu.memory_space<vmem>>) attributes {dimension_semantics = [#tpu.dimension_semantics<parallel>], iteration_bounds = array<i64: 2>, scalar_prefetch = 0 : i64, scratch_operands = 0 : i64, tpu.core_type = #tpu.core_type<tc>, window_params = [{transform_indices = @transform_0, window_bounds = array<i64: 128, 32>}, {pipeline_mode = #tpu.pipeline_mode<synchronous>, transform_indices = @transform_1, window_bounds = array<i64: 10, 32>}, {pipeline_mode = #tpu.pipeline_mode<synchronous>, transform_indices = @transform_2, window_bounds = array<i64: 5, 10>}, {pipeline_mode = #tpu.pipeline_mode<synchronous>, transform_indices = @transform_3, window_bounds = array<i64: 5, 1>}, {pipeline_mode = #tpu.pipeline_mode<synchronous>, transform_indices = @transform_4, window_bounds = array<i64: 32, 1>}, {transform_indices = @transform_5, window_bounds = array<i64: 1, 128>}]} {
    %c0 = arith.constant 0 : index
    %c0_0 = arith.constant 0 : index
    %0 = vector.load %arg1[%c0, %c0_0] : memref<128x32xf32, #tpu.memory_space<vmem>>, vector<128x32xf32>
    %c0_1 = arith.constant 0 : index
    %c0_2 = arith.constant 0 : index
    %1 = vector.load %arg5[%c0_1, %c0_2] : memref<32x1xf32, #tpu.memory_space<vmem>>, vector<32x1xf32>
    %2 = vector.extract_strided_slice %1 {offsets = [0, 0], sizes = [10, 1], strides = [1, 1]} : vector<32x1xf32> to vector<10x1xf32>
    %3 = vector.extract_strided_slice %1 {offsets = [16, 0], sizes = [5, 1], strides = [1, 1]} : vector<32x1xf32> to vector<5x1xf32>
    %4 = vector.extract_strided_slice %1 {offsets = [24, 0], sizes = [1, 1], strides = [1, 1]} : vector<32x1xf32> to vector<1x1xf32>
    %c0_3 = arith.constant 0 : index
    %c0_4 = arith.constant 0 : index
    %5 = vector.load %arg2[%c0_3, %c0_4] : memref<10x32xf32, #tpu.memory_space<vmem>>, vector<10x32xf32>
    %cst = arith.constant dense<0.000000e+00> : vector<10x128xf32>
    %6 = tpu.matmul %5, %0, %cst {dimension_numbers = #tpu.dot_dimension_numbers<[1], [1], [0], [0], [0, 0, 1, 0], [], []>, precision = #tpu.contract_precision<fp32>} : vector<10x32xf32>, vector<128x32xf32>, vector<10x128xf32> -> vector<10x128xf32>
    %7 = vector.broadcast %2 : vector<10x1xf32> to vector<10x128xf32>
    %8 = arith.addf %6, %7 : vector<10x128xf32>
    %cst_5 = arith.constant 0.000000e+00 : f32
    %9 = vector.broadcast %cst_5 : f32 to vector<10x128xf32>
    %10 = arith.maximumf %8, %9 : vector<10x128xf32>
    %c0_6 = arith.constant 0 : index
    %c0_7 = arith.constant 0 : index
    %11 = vector.load %arg3[%c0_6, %c0_7] : memref<5x10xf32, #tpu.memory_space<vmem>>, vector<5x10xf32>
    %cst_8 = arith.constant dense<0.000000e+00> : vector<5x128xf32>
    %12 = tpu.matmul %11, %10, %cst_8 {dimension_numbers = #tpu.dot_dimension_numbers<[1], [0], [0], [1], [0, 0, 1, 1], [], []>, precision = #tpu.contract_precision<fp32>} : vector<5x10xf32>, vector<10x128xf32>, vector<5x128xf32> -> vector<5x128xf32>
    %13 = vector.broadcast %3 : vector<5x1xf32> to vector<5x128xf32>
    %14 = arith.addf %12, %13 : vector<5x128xf32>
    %cst_9 = arith.constant 0.000000e+00 : f32
    %15 = vector.broadcast %cst_9 : f32 to vector<5x128xf32>
    %16 = arith.maximumf %14, %15 : vector<5x128xf32>
    %c0_10 = arith.constant 0 : index
    %c0_11 = arith.constant 0 : index
    %17 = vector.load %arg4[%c0_10, %c0_11] : memref<5x1xf32, #tpu.memory_space<vmem>>, vector<5x1xf32>
    %18 = vector.broadcast %17 : vector<5x1xf32> to vector<5x128xf32>
    %19 = arith.mulf %18, %16 : vector<5x128xf32>
    %cst_12 = arith.constant dense<0.000000e+00> : vector<128xf32>
    %20 = vector.multi_reduction <add>, %19, %cst_12 [0] : vector<5x128xf32> to vector<128xf32>
    %21 = vector.shape_cast %20 : vector<128xf32> to vector<1x128xf32>
    %22 = vector.broadcast %4 : vector<1x1xf32> to vector<1x128xf32>
    %23 = arith.addf %21, %22 : vector<1x128xf32>
    %24 = arith.negf %23 : vector<1x128xf32>
    %25 = math.exp %24 : vector<1x128xf32>
    %cst_13 = arith.constant 1.000000e+00 : f32
    %26 = vector.broadcast %cst_13 : f32 to vector<1x128xf32>
    %27 = arith.addf %26, %25 : vector<1x128xf32>
    %28 = arith.divf %26, %27 : vector<1x128xf32>
    %c0_14 = arith.constant 0 : index
    %c0_15 = arith.constant 0 : index
    %29 = vector.load %arg6[%c0_14, %c0_15] : memref<1x128xf32, #tpu.memory_space<vmem>>, vector<1x128xf32>
    tpu.vector_store %arg6[%c0_14, %c0_15], %28 {strides = array<i32>} : memref<1x128xf32, #tpu.memory_space<vmem>>, vector<1x128xf32>,
    return
  }
  func.func @transform_0(%arg0: i32) -> (i32, i32) {
    %c0_i32 = arith.constant 0 : i32
    %c0_i32_0 = arith.constant 0 : i32
    return %arg0, %c0_i32 : i32, i32
  }
  func.func @transform_1(%arg0: i32) -> (i32, i32) {
    %c0_i32 = arith.constant 0 : i32
    %c0_i32_0 = arith.constant 0 : i32
    %c0_i32_1 = arith.constant 0 : i32
    return %c0_i32, %c0_i32_0 : i32, i32
  }
  func.func @transform_2(%arg0: i32) -> (i32, i32) {
    %c0_i32 = arith.constant 0 : i32
    %c0_i32_0 = arith.constant 0 : i32
    %c0_i32_1 = arith.constant 0 : i32
    return %c0_i32, %c0_i32_0 : i32, i32
  }
  func.func @transform_3(%arg0: i32) -> (i32, i32) {
    %c0_i32 = arith.constant 0 : i32
    %c0_i32_0 = arith.constant 0 : i32
    %c0_i32_1 = arith.constant 0 : i32
    return %c0_i32, %c0_i32_0 : i32, i32
  }
  func.func @transform_4(%arg0: i32) -> (i32, i32) {
    %c0_i32 = arith.constant 0 : i32
    %c0_i32_0 = arith.constant 0 : i32
    %c0_i32_1 = arith.constant 0 : i32
    return %c0_i32, %c0_i32_0 : i32, i32
  }
  func.func @transform_5(%arg0: i32) -> (i32, i32) {
    %c0_i32 = arith.constant 0 : i32
    %c0_i32_0 = arith.constant 0 : i32
    return %c0_i32, %arg0 : i32, i32
  }
}

</mosaic_0001>

<llo_original>
// kernel: tpu_custom_call.1
$region0: #{tpu_custom_call.1}
  #allocation0 [shape = 'u32[]', space=smem, size = 0x4, offset = 0x4, fixed_abs, tag = 'smem constant byte address 0x4 - core index']
  #allocation1 [shape = 'u32[144,128]{1,0:T(1,128)}', space=vmem, size = 0x12000, scoped, tag = 'internal scratch']
  %s0 = inlined_call_operand.vmem [shape: f32[256,32], index: 0, kind: input, shape index: {}]
  %s1 = inlined_call_operand.vmem [shape: f32[10,32], index: 1, kind: input, shape index: {}]
  %s2 = inlined_call_operand.vmem [shape: f32[5,10], index: 2, kind: input, shape index: {}]
  %s3 = inlined_call_operand.vmem [shape: f32[5,1], index: 3, kind: input, shape index: {}]
  %s4 = inlined_call_operand.vmem [shape: f32[32,1], index: 4, kind: input, shape index: {}]
  %s5 = inlined_call_operand.hbm [shape: f32[1,256], index: 5, kind: output, shape index: {}]
  %s6 = sld [smem:[#allocation0]]
  $region53: #{tpu_custom_call.1} parent=0
    _
  %s8 = ssub.s32 1, %s6
  %s9 = scalar_select 0, %s8, %s6
  $region1: #{tpu_custom_call.1} parent=0
    #allocation2 [shape = 'u8[1024]{0}', space=vmem, size = 0x400, scoped, tag = 'output window, operand 0']
    #allocation3 [shape = 's32[2]{0}', space=sflag, size = 0x8, scoped, tag = 'scoped memory for tpu_custom_call.1']
    %10 = vsyncpa [#allocation3], 0
    %s11 = scalar_lea.sflag [#allocation3], 1
    %12 = vsyncpa %s11, 0
    loop: start=0, step=1, limit=4
    $region2: #{tpu_custom_call.1} parent=1 // loop_pre_header
      _
    $region3: #{tpu_custom_call.1} parent=1 // loop_header
      %s14 = sphi 0, %s18
      %p15 = scmp.ge.s32.totalorder %s14, 4
      %s24 = sphi 0, %s26
      %s27 = sphi 0, %s24
      %s28 = sphi 0, %s27
      %s44 = sphi 0, %s28
      %s48 = sphi 0, %s48
      %s50 = sphi 0, %s48
      %s51 = sphi 0, %s50
      %s65 = sphi 0, %s51
      %s69 = sphi 0, %s69
      %s71 = sphi 0, %s69
      %s72 = sphi 0, %s71
      %s86 = sphi 0, %s72
      %s90 = sphi 0, %s90
      %s92 = sphi 0, %s90
      %s93 = sphi 0, %s92
      %s107 = sphi 0, %s93
      %s111 = sphi 0, %s111
      %s113 = sphi 0, %s111
      %s114 = sphi 0, %s113
      %s128 = sphi 0, %s114
      %s134 = sphi 0, %s136
      %s137 = sphi 0, %s134
      %s138 = sphi 0, %s137
      %s154 = sphi 0, %s138
    $region4: #{tpu_custom_call.1} parent=1 // loop_header_branch
      %17 = sbr.rel (%p15) target = $region8
    $region5: #{tpu_custom_call.1} parent=1 // loop_body
      %s19 = ssub.s32 %s14, 1
      %s20 = ssub.s32 %s14, 2
      %s21 = sadd.s32 %s14, 1
      %s22 = ssub.s32 %s14, %s21
      %p23 = scmp.eq.s32.totalorder %s22, 0
      %s25 = sadd.s32 %s24, 1
      %s26 = scalar_select %p23, %s24, %s25
      %p29 = pneg %p23
      %p30 = scmp.eq.s32.totalorder %s14, 1
      %p31 = por %p29, %p30
      %p32 = scmp.ne.s32.totalorder %s24, %s27
      %p33 = scmp.eq.s32.totalorder %s14, 0
      %p34 = por %p32, %p33
      %p35 = scmp.ne.s32.totalorder %s24, %s27
      %p36 = scmp.eq.s32.totalorder %s19, 1
      %p37 = por %p35, %p36
      %p38 = scmp.ne.s32.totalorder %s27, %s28
      %p39 = scmp.eq.s32.totalorder %s19, 0
      %p40 = por %p38, %p39
      %p41 = scmp.ne.s32.totalorder %s27, %s28
      %p42 = scmp.eq.s32.totalorder %s20, 1
      %p43 = por %p41, %p42
      %p45 = scmp.ne.s32.totalorder %s28, %s44
      %p46 = scmp.eq.s32.totalorder %s20, 0
      %p47 = por %p45, %p46
      %s49 = sadd.s32 %s48, 1
      %p52 = scmp.eq.s32.totalorder %s14, 1
      %p53 = scmp.ne.s32.totalorder %s48, %s50
      %p54 = scmp.eq.s32.totalorder %s14, 0
      %p55 = por %p53, %p54
      %p56 = scmp.ne.s32.totalorder %s48, %s50
      %p57 = scmp.eq.s32.totalorder %s19, 1
      %p58 = por %p56, %p57
      %p59 = scmp.ne.s32.totalorder %s50, %s51
      %p60 = scmp.eq.s32.totalorder %s19, 0
      %p61 = por %p59, %p60
      %p62 = scmp.ne.s32.totalorder %s50, %s51
      %p63 = scmp.eq.s32.totalorder %s20, 1
      %p64 = por %p62, %p63
      %p66 = scmp.ne.s32.totalorder %s51, %s65
      %p67 = scmp.eq.s32.totalorder %s20, 0
      %p68 = por %p66, %p67
      %s70 = sadd.s32 %s69, 1
      %p73 = scmp.eq.s32.totalorder %s14, 1
      %p74 = scmp.ne.s32.totalorder %s69, %s71
      %p75 = scmp.eq.s32.totalorder %s14, 0
      %p76 = por %p74, %p75
      %p77 = scmp.ne.s32.totalorder %s69, %s71
      %p78 = scmp.eq.s32.totalorder %s19, 1
      %p79 = por %p77, %p78
      %p80 = scmp.ne.s32.totalorder %s71, %s72
      %p81 = scmp.eq.s32.totalorder %s19, 0
      %p82 = por %p80, %p81
      %p83 = scmp.ne.s32.totalorder %s71, %s72
      %p84 = scmp.eq.s32.totalorder %s20, 1
      %p85 = por %p83, %p84
      %p87 = scmp.ne.s32.totalorder %s72, %s86
      %p88 = scmp.eq.s32.totalorder %s20, 0
      %p89 = por %p87, %p88
      %s91 = sadd.s32 %s90, 1
      %p94 = scmp.eq.s32.totalorder %s14, 1
      %p95 = scmp.ne.s32.totalorder %s90, %s92
      %p96 = scmp.eq.s32.totalorder %s14, 0
      %p97 = por %p95, %p96
      %p98 = scmp.ne.s32.totalorder %s90, %s92
      %p99 = scmp.eq.s32.totalorder %s19, 1
      %p100 = por %p98, %p99
      %p101 = scmp.ne.s32.totalorder %s92, %s93
      %p102 = scmp.eq.s32.totalorder %s19, 0
      %p103 = por %p101, %p102
      %p104 = scmp.ne.s32.totalorder %s92, %s93
      %p105 = scmp.eq.s32.totalorder %s20, 1
      %p106 = por %p104, %p105
      %p108 = scmp.ne.s32.totalorder %s93, %s107
      %p109 = scmp.eq.s32.totalorder %s20, 0
      %p110 = por %p108, %p109
      %s112 = sadd.s32 %s111, 1
      %p115 = scmp.eq.s32.totalorder %s14, 1
      %p116 = scmp.ne.s32.totalorder %s111, %s113
      %p117 = scmp.eq.s32.totalorder %s14, 0
      %p118 = por %p116, %p117
      %p119 = scmp.ne.s32.totalorder %s111, %s113
      %p120 = scmp.eq.s32.totalorder %s19, 1
      %p121 = por %p119, %p120
      %p122 = scmp.ne.s32.totalorder %s113, %s114
      %p123 = scmp.eq.s32.totalorder %s19, 0
      %p124 = por %p122, %p123
      %p125 = scmp.ne.s32.totalorder %s113, %s114
      %p126 = scmp.eq.s32.totalorder %s20, 1
      %p127 = por %p125, %p126
      %p129 = scmp.ne.s32.totalorder %s114, %s128
      %p130 = scmp.eq.s32.totalorder %s20, 0
      %p131 = por %p129, %p130
      %s132 = ssub.s32 %s14, %s21
      %p133 = scmp.eq.s32.totalorder %s132, 0
      %s135 = sadd.s32 %s134, 1
      %s136 = scalar_select %p133, %s134, %s135
      %p139 = pneg %p133
      %p140 = scmp.eq.s32.totalorder %s14, 1
      %p141 = por %p139, %p140
      %p142 = scmp.ne.s32.totalorder %s134, %s137
      %p143 = scmp.eq.s32.totalorder %s14, 0
      %p144 = por %p142, %p143
      %p145 = scmp.ne.s32.totalorder %s134, %s137
      %p146 = scmp.eq.s32.totalorder %s19, 1
      %p147 = por %p145, %p146
      %p148 = scmp.ne.s32.totalorder %s137, %s138
      %p149 = scmp.eq.s32.totalorder %s19, 0
      %p150 = por %p148, %p149
      %p151 = scmp.ne.s32.totalorder %s137, %s138
      %p152 = scmp.eq.s32.totalorder %s20, 1
      %p153 = por %p151, %p152
      %p155 = scmp.ne.s32.totalorder %s138, %s154
      %p156 = scmp.eq.s32.totalorder %s20, 0
      %p157 = por %p155, %p156
      %p158 = scmp.le.s32.totalorder 1, %s14
      %p159 = scmp.lt.s32.totalorder %s14, 3
      %p160 = pnand %p158, %p159
      %p161 = pneg %p160
      // Predicated region
      $region9: #{tpu_custom_call.1} parent=5 // pred_check
        _
      $region10: #{tpu_custom_call.1} parent=5 // pred_check_branch
        %163 = sbr.rel (%p160) target = $region12
      $region11: #{tpu_custom_call.1} parent=5 // pred_region
        %s164 = ssub.s32 %s14, 1
        // Predicated region
        $region13: #{tpu_custom_call.1} parent=11 // pred_check
          %p165 = pneg %p61
        $region14: #{tpu_custom_call.1} parent=11 // pred_check_branch
          %167 = sbr.rel (%p165) target = $region16
        $region15: #{tpu_custom_call.1} parent=11 // pred_region
          _
        $region16: #{tpu_custom_call.1} parent=11 // pred_fallthru
          _
        // Predicated region
        $region17: #{tpu_custom_call.1} parent=11 // pred_check
          %p168 = pneg %p82
        $region18: #{tpu_custom_call.1} parent=11 // pred_check_branch
          %170 = sbr.rel (%p168) target = $region20
        $region19: #{tpu_custom_call.1} parent=11 // pred_region
          _
        $region20: #{tpu_custom_call.1} parent=11 // pred_fallthru
          _
        // Predicated region
        $region21: #{tpu_custom_call.1} parent=11 // pred_check
          %p171 = pneg %p103
        $region22: #{tpu_custom_call.1} parent=11 // pred_check_branch
          %173 = sbr.rel (%p171) target = $region24
        $region23: #{tpu_custom_call.1} parent=11 // pred_region
          _
        $region24: #{tpu_custom_call.1} parent=11 // pred_fallthru
          _
        // Predicated region
        $region25: #{tpu_custom_call.1} parent=11 // pred_check
          %p174 = pneg %p124
        $region26: #{tpu_custom_call.1} parent=11 // pred_check_branch
          %176 = sbr.rel (%p174) target = $region28
        $region27: #{tpu_custom_call.1} parent=11 // pred_region
          _
        $region28: #{tpu_custom_call.1} parent=11 // pred_fallthru
          _
      $region12: #{tpu_custom_call.1} parent=5 // pred_fallthru
        _
      %p177 = scmp.lt.s32.totalorder %s14, 2
      // Predicated region
      $region29: #{tpu_custom_call.1} parent=5 // pred_check
        %p178 = pneg %p177
      $region30: #{tpu_custom_call.1} parent=5 // pred_check_branch
        %180 = sbr.rel (%p178) target = $region32
      $region31: #{tpu_custom_call.1} parent=5 // pred_region
        // Predicated region
        $region33: #{tpu_custom_call.1} parent=31 // pred_check
          %p181 = pneg %p34
        $region34: #{tpu_custom_call.1} parent=31 // pred_check_branch
          %183 = sbr.rel (%p181) target = $region36
        $region35: #{tpu_custom_call.1} parent=31 // pred_region
          %s184 = smul.u32 16, %s14
          %p185 = scmp.lt.s32.totalorder %s184, 31
          %s186 = scalar_select %p185, %s184, 31
          %s187 = smul.addr %s186, 8
          %s188 = scalar_lea.vmem %s0, %s187
          %s189 = smul.u32 16, %s14
        $region36: #{tpu_custom_call.1} parent=31 // pred_fallthru
          _
      $region32: #{tpu_custom_call.1} parent=5 // pred_fallthru
        _
      %p190 = scmp.le.s32.totalorder 1, %s14
      %p191 = scmp.lt.s32.totalorder %s14, 3
      %p192 = pnand %p190, %p191
      %p193 = pneg %p192
      // Predicated region
      $region37: #{tpu_custom_call.1} parent=5 // pred_check
        _
      $region38: #{tpu_custom_call.1} parent=5 // pred_check_branch
        %195 = sbr.rel (%p192) target = $region40
      $region39: #{tpu_custom_call.1} parent=5 // pred_region
        %s196 = ssub.s32 %s14, 1
        %s197 = smul.u32 16, %s19
        %p198 = scmp.lt.s32.totalorder %s197, 31
        %s199 = scalar_select %p198, %s197, 31
        %s200 = smul.addr %s199, 8
        %s201 = scalar_lea.vmem %s0, %s200
        %p202 = pneg %p40
        %p203 = pneg %p37
        %p204 = pneg %p61
        %p205 = pneg %p58
        %p206 = pneg %p82
        %p207 = pneg %p79
        %p208 = pneg %p103
        %p209 = pneg %p100
        %p210 = pneg %p124
        %p211 = pneg %p121
        %p212 = pneg %p150
        %p213 = pneg %p147
        %s214 = sand.u32 %s137, 1
        %s215 = scalar_lea.sflag [#allocation3], %s214
        %s216 = sand.u32 %s137, 1
        %s217 = scalar_lea.vmem [#allocation2], %s216
        %s218 = smul.u32 16, %s19
        %p219 = scmp.lt.s32.totalorder %s218, 31
        %s220 = scalar_select %p219, %s218, 31
        %s221 = smul.addr %s220, 8
        %s222 = scalar_lea.vmem %s0, %s221
        %s223 = smul.u32 16, %s19
        %v224 = vld [vmem:[%s222] sm:$0xff]
        %v225 = vld [vmem:[%s222 + $0x8] sm:$0xff]
        %v226 = vld [vmem:[%s222 + $0x10] sm:$0xff]
        %v227 = vld [vmem:[%s222 + $0x18] sm:$0xff]
        %v228 = vld [vmem:[%s222 + $0x20] sm:$0xff]
        %v229 = vld [vmem:[%s222 + $0x28] sm:$0xff]
        %v230 = vld [vmem:[%s222 + $0x30] sm:$0xff]
        %v231 = vld [vmem:[%s222 + $0x38] sm:$0xff]
        %v232 = vld [vmem:[%s222 + $0x40] sm:$0xff]
        %v233 = vld [vmem:[%s222 + $0x48] sm:$0xff]
        %v234 = vld [vmem:[%s222 + $0x50] sm:$0xff]
        %v235 = vld [vmem:[%s222 + $0x58] sm:$0xff]
        %v236 = vld [vmem:[%s222 + $0x60] sm:$0xff]
        %v237 = vld [vmem:[%s222 + $0x68] sm:$0xff]
        %v238 = vld [vmem:[%s222 + $0x70] sm:$0xff]
        %v239 = vld [vmem:[%s222 + $0x78] sm:$0xff]
        %v240 = vld [vmem:[%s4] sm:$0xff]
        %v241 = vld [vmem:[%s4 + $0x8] sm:$0xff]
        %v242 = vld [vmem:[%s4 + $0x10] sm:$0xff]
        %v243 = vld [vmem:[%s4 + $0x18] sm:$0xff]
        %v244 = vld [vmem:[%s1] sm:$0xff]
        %v245 = vld [vmem:[%s1 + $0x8] sm:$0x3]
        %247 = vset.pattern.permute.xlu0 0
        %248 = vperm.xlu0 %247, %v240
        %v249 = vpop.permute.xlu0 %248
        %252 = vset.pattern.permute.xlu0 0
        %253 = vperm.xlu0 %252, %v241
        %v254 = vpop.permute.xlu0 %253
        %vm256 = vcmask 261120
        %v258 = vsel %vm256, %v244, 0
        %v261 = vsel %vm256, %v245, 0
        %v264 = vsel %vm256, %v224, 0
        %v267 = vsel %vm256, %v225, 0
        %v270 = vsel %vm256, %v226, 0
        %v273 = vsel %vm256, %v227, 0
        %v276 = vsel %vm256, %v228, 0
        %v279 = vsel %vm256, %v229, 0
        %v282 = vsel %vm256, %v230, 0
        %v285 = vsel %vm256, %v231, 0
        %v288 = vsel %vm256, %v232, 0
        %v291 = vsel %vm256, %v233, 0
        %v294 = vsel %vm256, %v234, 0
        %v297 = vsel %vm256, %v235, 0
        %v300 = vsel %vm256, %v236, 0
        %v303 = vsel %vm256, %v237, 0
        %v306 = vsel %vm256, %v238, 0
        %v309 = vsel %vm256, %v239, 0
        %311 = vmatprep.subr.mxu0 0.0
        %v312 = vand.u32 %v309, 4294901760
        %313 = vmatpush1.xpose.msra.mxu0 %v312
        %314 = vmatprep.subr.mxu0 0.0
        %v315 = vand.u32 %v306, 4294901760
        %316 = vmatpush1.xpose.msra.mxu0 %v315
        %317 = vmatprep.subr.mxu0 0.0
        %v318 = vand.u32 %v303, 4294901760
        %319 = vmatpush1.xpose.msra.mxu0 %v318
        %320 = vmatprep.subr.mxu0 0.0
        %v321 = vand.u32 %v300, 4294901760
        %322 = vmatpush1.xpose.msra.mxu0 %v321
        %323 = vmatprep.subr.mxu0 0.0
        %v324 = vand.u32 %v297, 4294901760
        %325 = vmatpush1.xpose.msra.mxu0 %v324
        %326 = vmatprep.subr.mxu0 0.0
        %v327 = vand.u32 %v294, 4294901760
        %328 = vmatpush1.xpose.msra.mxu0 %v327
        %329 = vmatprep.subr.mxu0 0.0
        %v330 = vand.u32 %v291, 4294901760
        %331 = vmatpush1.xpose.msra.mxu0 %v330
        %332 = vmatprep.subr.mxu0 0.0
        %v333 = vand.u32 %v288, 4294901760
        %334 = vmatpush1.xpose.msra.mxu0 %v333
        %335 = vmatprep.subr.mxu0 0.0
        %v336 = vand.u32 %v285, 4294901760
        %337 = vmatpush1.xpose.msra.mxu0 %v336
        %338 = vmatprep.subr.mxu0 0.0
        %v339 = vand.u32 %v282, 4294901760
        %340 = vmatpush1.xpose.msra.mxu0 %v339
        %341 = vmatprep.subr.mxu0 0.0
        %v342 = vand.u32 %v279, 4294901760
        %343 = vmatpush1.xpose.msra.mxu0 %v342
        %344 = vmatprep.subr.mxu0 0.0
        %v345 = vand.u32 %v276, 4294901760
        %346 = vmatpush1.xpose.msra.mxu0 %v345
        %347 = vmatprep.subr.mxu0 0.0
        %v348 = vand.u32 %v273, 4294901760
        %349 = vmatpush1.xpose.msra.mxu0 %v348
        %350 = vmatprep.subr.mxu0 0.0
        %v351 = vand.u32 %v270, 4294901760
        %352 = vmatpush1.xpose.msra.mxu0 %v351
        %353 = vmatprep.subr.mxu0 0.0
        %v354 = vand.u32 %v267, 4294901760
        %355 = vmatpush1.xpose.msra.mxu0 %v354
        %356 = vmatprep.subr.mxu0 0.0
        %v357 = vand.u32 %v264, 4294901760
        %358 = vmatpush1.xpose.msra.mxu0 %v357
        %359 = vmatprep.subr.mxu0 0.0
        %360 = vmatpush2.xpose.msra.mxu0 0.0
        %361 = vmatprep.subr.mxu0 0.0
        %362 = vmatpush2.xpose.msra.mxu0 0.0
        %363 = vmatprep.subr.mxu0 0.0
        %364 = vmatpush2.xpose.msra.mxu0 0.0
        %365 = vmatprep.subr.mxu0 0.0
        %366 = vmatpush2.xpose.msra.mxu0 0.0
        %367 = vmatprep.subr.mxu0 0.0
        %368 = vmatpush2.xpose.msra.mxu0 0.0
        %369 = vmatprep.subr.mxu0 0.0
        %370 = vmatpush2.xpose.msra.mxu0 0.0
        %371 = vmatprep.subr.mxu0 0.0
        %372 = vmatpush2.xpose.msra.mxu0 0.0
        %373 = vmatprep.subr.mxu0 0.0
        %374 = vmatpush2.xpose.msra.mxu0 0.0
        %375 = vmatprep.subr.mxu0 0.0
        %376 = vmatpush2.xpose.msra.mxu0 0.0
        %377 = vmatprep.subr.mxu0 0.0
        %378 = vmatpush2.xpose.msra.mxu0 0.0
        %379 = vmatprep.subr.mxu0 0.0
        %380 = vmatpush2.xpose.msra.mxu0 0.0
        %381 = vmatprep.subr.mxu0 0.0
        %382 = vmatpush2.xpose.msra.mxu0 0.0
        %383 = vmatprep.subr.mxu0 0.0
        %384 = vmatpush2.xpose.msra.mxu0 0.0
        %385 = vmatprep.subr.mxu0 0.0
        %386 = vmatpush2.xpose.msra.mxu0 0.0
        %387 = vmatprep.subr.mxu0 0.0
        %388 = vmatpush2.xpose.msra.mxu0 0.0
        %389 = vmatprep.subr.mxu0 0.0
        %390 = vmatpush2.xpose.msra.mxu0 0.0
        %391 = vmatprep.mubr.f32.mxu0 0.0
        %v392 = vand.u32 %v258, 4294901760
        %v393 = vsub.f32 %v258, %v392
        %v394 = vand.u32 %v393, 4294901760
        %v395 = vsub.f32 %v393, %v394
        %v396 = vand.u32 %v395, 4294901760
        %397 = vmatmul.mubr.f32.gmra.mxu0 %v396
        %v398 = vpop.f32.mrf.mxu0
        %v399 = vadd.f32 %v249, %v398
        %v400 = vpop.f32.mrf.mxu0
        %401 = vmatprep.mubr.f32.mxu0 0.0
        %v402 = vand.u32 %v261, 4294901760
        %v403 = vsub.f32 %v261, %v402
        %v404 = vand.u32 %v403, 4294901760
        %v405 = vsub.f32 %v403, %v404
        %v406 = vand.u32 %v405, 4294901760
        %407 = vmatmul.mubr.f32.gmra.mxu0 %v406
        %v408 = vpop.f32.mrf.mxu0
        %v409 = vadd.f32 %v254, %v408
        %v410 = vpop.f32.mrf.mxu0
        %411 = vdwg.mxu0
        %412 = vmatprep.subr.mxu0 0.0
        %v413 = vand.u32 %v309, 4294901760
        %v414 = vsub.f32 %v309, %v413
        %v415 = vand.u32 %v414, 4294901760
        %v416 = vsub.f32 %v414, %v415
        %v417 = vand.u32 %v416, 4294901760
        %418 = vmatpush1.xpose.msra.mxu0 %v417
        %419 = vmatprep.subr.mxu0 0.0
        %v420 = vand.u32 %v306, 4294901760
        %v421 = vsub.f32 %v306, %v420
        %v422 = vand.u32 %v421, 4294901760
        %v423 = vsub.f32 %v421, %v422
        %v424 = vand.u32 %v423, 4294901760
        %425 = vmatpush1.xpose.msra.mxu0 %v424
        %426 = vmatprep.subr.mxu0 0.0
        %v427 = vand.u32 %v303, 4294901760
        %v428 = vsub.f32 %v303, %v427
        %v429 = vand.u32 %v428, 4294901760
        %v430 = vsub.f32 %v428, %v429
        %v431 = vand.u32 %v430, 4294901760
        %432 = vmatpush1.xpose.msra.mxu0 %v431
        %433 = vmatprep.subr.mxu0 0.0
        %v434 = vand.u32 %v300, 4294901760
        %v435 = vsub.f32 %v300, %v434
        %v436 = vand.u32 %v435, 4294901760
        %v437 = vsub.f32 %v435, %v436
        %v438 = vand.u32 %v437, 4294901760
        %439 = vmatpush1.xpose.msra.mxu0 %v438
        %440 = vmatprep.subr.mxu0 0.0
        %v441 = vand.u32 %v297, 4294901760
        %v442 = vsub.f32 %v297, %v441
        %v443 = vand.u32 %v442, 4294901760
        %v444 = vsub.f32 %v442, %v443
        %v445 = vand.u32 %v444, 4294901760
        %446 = vmatpush1.xpose.msra.mxu0 %v445
        %447 = vmatprep.subr.mxu0 0.0
        %v448 = vand.u32 %v294, 4294901760
        %v449 = vsub.f32 %v294, %v448
        %v450 = vand.u32 %v449, 4294901760
        %v451 = vsub.f32 %v449, %v450
        %v452 = vand.u32 %v451, 4294901760
        %453 = vmatpush1.xpose.msra.mxu0 %v452
        %454 = vmatprep.subr.mxu0 0.0
        %v455 = vand.u32 %v291, 4294901760
        %v456 = vsub.f32 %v291, %v455
        %v457 = vand.u32 %v456, 4294901760
        %v458 = vsub.f32 %v456, %v457
        %v459 = vand.u32 %v458, 4294901760
        %460 = vmatpush1.xpose.msra.mxu0 %v459
        %461 = vmatprep.subr.mxu0 0.0
        %v462 = vand.u32 %v288, 4294901760
        %v463 = vsub.f32 %v288, %v462
        %v464 = vand.u32 %v463, 4294901760
        %v465 = vsub.f32 %v463, %v464
        %v466 = vand.u32 %v465, 4294901760
        %467 = vmatpush1.xpose.msra.mxu0 %v466
        %468 = vmatprep.subr.mxu0 0.0
        %v469 = vand.u32 %v285, 4294901760
        %v470 = vsub.f32 %v285, %v469
        %v471 = vand.u32 %v470, 4294901760
        %v472 = vsub.f32 %v470, %v471
        %v473 = vand.u32 %v472, 4294901760
        %474 = vmatpush1.xpose.msra.mxu0 %v473
        %475 = vmatprep.subr.mxu0 0.0
        %v476 = vand.u32 %v282, 4294901760
        %v477 = vsub.f32 %v282, %v476
        %v478 = vand.u32 %v477, 4294901760
        %v479 = vsub.f32 %v477, %v478
        %v480 = vand.u32 %v479, 4294901760
        %481 = vmatpush1.xpose.msra.mxu0 %v480
        %482 = vmatprep.subr.mxu0 0.0
        %v483 = vand.u32 %v279, 4294901760
        %v484 = vsub.f32 %v279, %v483
        %v485 = vand.u32 %v484, 4294901760
        %v486 = vsub.f32 %v484, %v485
        %v487 = vand.u32 %v486, 4294901760
        %488 = vmatpush1.xpose.msra.mxu0 %v487
        %489 = vmatprep.subr.mxu0 0.0
        %v490 = vand.u32 %v276, 4294901760
        %v491 = vsub.f32 %v276, %v490
        %v492 = vand.u32 %v491, 4294901760
        %v493 = vsub.f32 %v491, %v492
        %v494 = vand.u32 %v493, 4294901760
        %495 = vmatpush1.xpose.msra.mxu0 %v494
        %496 = vmatprep.subr.mxu0 0.0
        %v497 = vand.u32 %v273, 4294901760
        %v498 = vsub.f32 %v273, %v497
        %v499 = vand.u32 %v498, 4294901760
        %v500 = vsub.f32 %v498, %v499
        %v501 = vand.u32 %v500, 4294901760
        %502 = vmatpush1.xpose.msra.mxu0 %v501
        %503 = vmatprep.subr.mxu0 0.0
        %v504 = vand.u32 %v270, 4294901760
        %v505 = vsub.f32 %v270, %v504
        %v506 = vand.u32 %v505, 4294901760
        %v507 = vsub.f32 %v505, %v506
        %v508 = vand.u32 %v507, 4294901760
        %509 = vmatpush1.xpose.msra.mxu0 %v508
        %510 = vmatprep.subr.mxu0 0.0
        %v511 = vand.u32 %v267, 4294901760
        %v512 = vsub.f32 %v267, %v511
        %v513 = vand.u32 %v512, 4294901760
        %v514 = vsub.f32 %v512, %v513
        %v515 = vand.u32 %v514, 4294901760
        %516 = vmatpush1.xpose.msra.mxu0 %v515
        %517 = vmatprep.subr.mxu0 0.0
        %v518 = vand.u32 %v264, 4294901760
        %v519 = vsub.f32 %v264, %v518
        %v520 = vand.u32 %v519, 4294901760
        %v521 = vsub.f32 %v519, %v520
        %v522 = vand.u32 %v521, 4294901760
        %523 = vmatpush1.xpose.msra.mxu0 %v522
        %524 = vmatprep.subr.mxu0 0.0
        %525 = vmatpush2.xpose.msra.mxu0 0.0
        %526 = vmatprep.subr.mxu0 0.0
        %527 = vmatpush2.xpose.msra.mxu0 0.0
        %528 = vmatprep.subr.mxu0 0.0
        %529 = vmatpush2.xpose.msra.mxu0 0.0
        %530 = vmatprep.subr.mxu0 0.0
        %531 = vmatpush2.xpose.msra.mxu0 0.0
        %532 = vmatprep.subr.mxu0 0.0
        %533 = vmatpush2.xpose.msra.mxu0 0.0
        %534 = vmatprep.subr.mxu0 0.0
        %535 = vmatpush2.xpose.msra.mxu0 0.0
        %536 = vmatprep.subr.mxu0 0.0
        %537 = vmatpush2.xpose.msra.mxu0 0.0
        %538 = vmatprep.subr.mxu0 0.0
        %539 = vmatpush2.xpose.msra.mxu0 0.0
        %540 = vmatprep.subr.mxu0 0.0
        %541 = vmatpush2.xpose.msra.mxu0 0.0
        %542 = vmatprep.subr.mxu0 0.0
        %543 = vmatpush2.xpose.msra.mxu0 0.0
        %544 = vmatprep.subr.mxu0 0.0
        %545 = vmatpush2.xpose.msra.mxu0 0.0
        %546 = vmatprep.subr.mxu0 0.0
        %547 = vmatpush2.xpose.msra.mxu0 0.0
        %548 = vmatprep.subr.mxu0 0.0
        %549 = vmatpush2.xpose.msra.mxu0 0.0
        %550 = vmatprep.subr.mxu0 0.0
        %551 = vmatpush2.xpose.msra.mxu0 0.0
        %552 = vmatprep.subr.mxu0 0.0
        %553 = vmatpush2.xpose.msra.mxu0 0.0
        %554 = vmatprep.subr.mxu0 0.0
        %555 = vmatpush2.xpose.msra.mxu0 0.0
        %556 = vmatprep.mubr.f32.mxu0 0.0
        %v557 = vand.u32 %v258, 4294901760
        %558 = vmatmul.mubr.f32.gmra.mxu0 %v557
        %v559 = vpop.f32.mrf.mxu0
        %v560 = vadd.f32 %v399, %v559
        %v561 = vpop.f32.mrf.mxu0
        %562 = vmatprep.mubr.f32.mxu0 0.0
        %v563 = vand.u32 %v261, 4294901760
        %564 = vmatmul.mubr.f32.gmra.mxu0 %v563
        %v565 = vpop.f32.mrf.mxu0
        %v566 = vadd.f32 %v409, %v565
        %v567 = vpop.f32.mrf.mxu0
        %568 = vdwg.mxu0
        %569 = vmatprep.subr.mxu0 0.0
        %v570 = vand.u32 %v309, 4294901760
        %v571 = vsub.f32 %v309, %v570
        %572 = vmatpush1.xpose.msra.mxu0 %v571
        %573 = vmatprep.subr.mxu0 0.0
        %v574 = vand.u32 %v306, 4294901760
        %v575 = vsub.f32 %v306, %v574
        %576 = vmatpush1.xpose.msra.mxu0 %v575
        %577 = vmatprep.subr.mxu0 0.0
        %v578 = vand.u32 %v303, 4294901760
        %v579 = vsub.f32 %v303, %v578
        %580 = vmatpush1.xpose.msra.mxu0 %v579
        %581 = vmatprep.subr.mxu0 0.0
        %v582 = vand.u32 %v300, 4294901760
        %v583 = vsub.f32 %v300, %v582
        %584 = vmatpush1.xpose.msra.mxu0 %v583
        %585 = vmatprep.subr.mxu0 0.0
        %v586 = vand.u32 %v297, 4294901760
        %v587 = vsub.f32 %v297, %v586
        %588 = vmatpush1.xpose.msra.mxu0 %v587
        %589 = vmatprep.subr.mxu0 0.0
        %v590 = vand.u32 %v294, 4294901760
        %v591 = vsub.f32 %v294, %v590
        %592 = vmatpush1.xpose.msra.mxu0 %v591
        %593 = vmatprep.subr.mxu0 0.0
        %v594 = vand.u32 %v291, 4294901760
        %v595 = vsub.f32 %v291, %v594
        %596 = vmatpush1.xpose.msra.mxu0 %v595
        %597 = vmatprep.subr.mxu0 0.0
        %v598 = vand.u32 %v288, 4294901760
        %v599 = vsub.f32 %v288, %v598
        %600 = vmatpush1.xpose.msra.mxu0 %v599
        %601 = vmatprep.subr.mxu0 0.0
        %v602 = vand.u32 %v285, 4294901760
        %v603 = vsub.f32 %v285, %v602
        %604 = vmatpush1.xpose.msra.mxu0 %v603
        %605 = vmatprep.subr.mxu0 0.0
        %v606 = vand.u32 %v282, 4294901760
        %v607 = vsub.f32 %v282, %v606
        %608 = vmatpush1.xpose.msra.mxu0 %v607
        %609 = vmatprep.subr.mxu0 0.0
        %v610 = vand.u32 %v279, 4294901760
        %v611 = vsub.f32 %v279, %v610
        %612 = vmatpush1.xpose.msra.mxu0 %v611
        %613 = vmatprep.subr.mxu0 0.0
        %v614 = vand.u32 %v276, 4294901760
        %v615 = vsub.f32 %v276, %v614
        %616 = vmatpush1.xpose.msra.mxu0 %v615
        %617 = vmatprep.subr.mxu0 0.0
        %v618 = vand.u32 %v273, 4294901760
        %v619 = vsub.f32 %v273, %v618
        %620 = vmatpush1.xpose.msra.mxu0 %v619
        %621 = vmatprep.subr.mxu0 0.0
        %v622 = vand.u32 %v270, 4294901760
        %v623 = vsub.f32 %v270, %v622
        %624 = vmatpush1.xpose.msra.mxu0 %v623
        %625 = vmatprep.subr.mxu0 0.0
        %v626 = vand.u32 %v267, 4294901760
        %v627 = vsub.f32 %v267, %v626
        %628 = vmatpush1.xpose.msra.mxu0 %v627
        %629 = vmatprep.subr.mxu0 0.0
        %v630 = vand.u32 %v264, 4294901760
        %v631 = vsub.f32 %v264, %v630
        %632 = vmatpush1.xpose.msra.mxu0 %v631
        %633 = vmatprep.subr.mxu0 0.0
        %634 = vmatpush2.xpose.msra.mxu0 0.0
        %635 = vmatprep.subr.mxu0 0.0
        %636 = vmatpush2.xpose.msra.mxu0 0.0
        %637 = vmatprep.subr.mxu0 0.0
        %638 = vmatpush2.xpose.msra.mxu0 0.0
        %639 = vmatprep.subr.mxu0 0.0
        %640 = vmatpush2.xpose.msra.mxu0 0.0
        %641 = vmatprep.subr.mxu0 0.0
        %642 = vmatpush2.xpose.msra.mxu0 0.0
        %643 = vmatprep.subr.mxu0 0.0
        %644 = vmatpush2.xpose.msra.mxu0 0.0
        %645 = vmatprep.subr.mxu0 0.0
        %646 = vmatpush2.xpose.msra.mxu0 0.0
        %647 = vmatprep.subr.mxu0 0.0
        %648 = vmatpush2.xpose.msra.mxu0 0.0
        %649 = vmatprep.subr.mxu0 0.0
        %650 = vmatpush2.xpose.msra.mxu0 0.0
        %651 = vmatprep.subr.mxu0 0.0
        %652 = vmatpush2.xpose.msra.mxu0 0.0
        %653 = vmatprep.subr.mxu0 0.0
        %654 = vmatpush2.xpose.msra.mxu0 0.0
        %655 = vmatprep.subr.mxu0 0.0
        %656 = vmatpush2.xpose.msra.mxu0 0.0
        %657 = vmatprep.subr.mxu0 0.0
        %658 = vmatpush2.xpose.msra.mxu0 0.0
        %659 = vmatprep.subr.mxu0 0.0
        %660 = vmatpush2.xpose.msra.mxu0 0.0
        %661 = vmatprep.subr.mxu0 0.0
        %662 = vmatpush2.xpose.msra.mxu0 0.0
        %663 = vmatprep.subr.mxu0 0.0
        %664 = vmatpush2.xpose.msra.mxu0 0.0
        %665 = vmatprep.mubr.f32.mxu0 0.0
        %v666 = vand.u32 %v258, 4294901760
        %v667 = vsub.f32 %v258, %v666
        %668 = vmatmul.mubr.f32.gmra.mxu0 %v667
        %v669 = vpop.f32.mrf.mxu0
        %v670 = vadd.f32 %v560, %v669
        %v671 = vpop.f32.mrf.mxu0
        %672 = vmatprep.mubr.f32.mxu0 0.0
        %v673 = vand.u32 %v261, 4294901760
        %v674 = vsub.f32 %v261, %v673
        %675 = vmatmul.mubr.f32.gmra.mxu0 %v674
        %v676 = vpop.f32.mrf.mxu0
        %v677 = vadd.f32 %v566, %v676
        %v678 = vpop.f32.mrf.mxu0
        %679 = vdwg.mxu0
        %680 = vmatprep.subr.mxu0 0.0
        %v681 = vand.u32 %v309, 4294901760
        %682 = vmatpush1.xpose.msra.mxu0 %v681
        %683 = vmatprep.subr.mxu0 0.0
        %v684 = vand.u32 %v306, 4294901760
        %685 = vmatpush1.xpose.msra.mxu0 %v684
        %686 = vmatprep.subr.mxu0 0.0
        %v687 = vand.u32 %v303, 4294901760
        %688 = vmatpush1.xpose.msra.mxu0 %v687
        %689 = vmatprep.subr.mxu0 0.0
        %v690 = vand.u32 %v300, 4294901760
        %691 = vmatpush1.xpose.msra.mxu0 %v690
        %692 = vmatprep.subr.mxu0 0.0
        %v693 = vand.u32 %v297, 4294901760
        %694 = vmatpush1.xpose.msra.mxu0 %v693
        %695 = vmatprep.subr.mxu0 0.0
        %v696 = vand.u32 %v294, 4294901760
        %697 = vmatpush1.xpose.msra.mxu0 %v696
        %698 = vmatprep.subr.mxu0 0.0
        %v699 = vand.u32 %v291, 4294901760
        %700 = vmatpush1.xpose.msra.mxu0 %v699
        %701 = vmatprep.subr.mxu0 0.0
        %v702 = vand.u32 %v288, 4294901760
        %703 = vmatpush1.xpose.msra.mxu0 %v702
        %704 = vmatprep.subr.mxu0 0.0
        %v705 = vand.u32 %v285, 4294901760
        %706 = vmatpush1.xpose.msra.mxu0 %v705
        %707 = vmatprep.subr.mxu0 0.0
        %v708 = vand.u32 %v282, 4294901760
        %709 = vmatpush1.xpose.msra.mxu0 %v708
        %710 = vmatprep.subr.mxu0 0.0
        %v711 = vand.u32 %v279, 4294901760
        %712 = vmatpush1.xpose.msra.mxu0 %v711
        %713 = vmatprep.subr.mxu0 0.0
        %v714 = vand.u32 %v276, 4294901760
        %715 = vmatpush1.xpose.msra.mxu0 %v714
        %716 = vmatprep.subr.mxu0 0.0
        %v717 = vand.u32 %v273, 4294901760
        %718 = vmatpush1.xpose.msra.mxu0 %v717
        %719 = vmatprep.subr.mxu0 0.0
        %v720 = vand.u32 %v270, 4294901760
        %721 = vmatpush1.xpose.msra.mxu0 %v720
        %722 = vmatprep.subr.mxu0 0.0
        %v723 = vand.u32 %v267, 4294901760
        %724 = vmatpush1.xpose.msra.mxu0 %v723
        %725 = vmatprep.subr.mxu0 0.0
        %v726 = vand.u32 %v264, 4294901760
        %727 = vmatpush1.xpose.msra.mxu0 %v726
        %728 = vmatprep.subr.mxu0 0.0
        %729 = vmatpush2.xpose.msra.mxu0 0.0
        %730 = vmatprep.subr.mxu0 0.0
        %731 = vmatpush2.xpose.msra.mxu0 0.0
        %732 = vmatprep.subr.mxu0 0.0
        %733 = vmatpush2.xpose.msra.mxu0 0.0
        %734 = vmatprep.subr.mxu0 0.0
        %735 = vmatpush2.xpose.msra.mxu0 0.0
        %736 = vmatprep.subr.mxu0 0.0
        %737 = vmatpush2.xpose.msra.mxu0 0.0
        %738 = vmatprep.subr.mxu0 0.0
        %739 = vmatpush2.xpose.msra.mxu0 0.0
        %740 = vmatprep.subr.mxu0 0.0
        %741 = vmatpush2.xpose.msra.mxu0 0.0
        %742 = vmatprep.subr.mxu0 0.0
        %743 = vmatpush2.xpose.msra.mxu0 0.0
        %744 = vmatprep.subr.mxu0 0.0
        %745 = vmatpush2.xpose.msra.mxu0 0.0
        %746 = vmatprep.subr.mxu0 0.0
        %747 = vmatpush2.xpose.msra.mxu0 0.0
        %748 = vmatprep.subr.mxu0 0.0
        %749 = vmatpush2.xpose.msra.mxu0 0.0
        %750 = vmatprep.subr.mxu0 0.0
        %751 = vmatpush2.xpose.msra.mxu0 0.0
        %752 = vmatprep.subr.mxu0 0.0
        %753 = vmatpush2.xpose.msra.mxu0 0.0
        %754 = vmatprep.subr.mxu0 0.0
        %755 = vmatpush2.xpose.msra.mxu0 0.0
        %756 = vmatprep.subr.mxu0 0.0
        %757 = vmatpush2.xpose.msra.mxu0 0.0
        %758 = vmatprep.subr.mxu0 0.0
        %759 = vmatpush2.xpose.msra.mxu0 0.0
        %760 = vmatprep.mubr.f32.mxu0 0.0
        %v761 = vand.u32 %v258, 4294901760
        %v762 = vsub.f32 %v258, %v761
        %v763 = vand.u32 %v762, 4294901760
        %764 = vmatmul.mubr.f32.gmra.mxu0 %v763
        %v765 = vpop.f32.mrf.mxu0
        %v766 = vadd.f32 %v670, %v765
        %v767 = vpop.f32.mrf.mxu0
        %768 = vmatprep.mubr.f32.mxu0 0.0
        %v769 = vand.u32 %v261, 4294901760
        %v770 = vsub.f32 %v261, %v769
        %v771 = vand.u32 %v770, 4294901760
        %772 = vmatmul.mubr.f32.gmra.mxu0 %v771
        %v773 = vpop.f32.mrf.mxu0
        %v774 = vadd.f32 %v677, %v773
        %v775 = vpop.f32.mrf.mxu0
        %776 = vdwg.mxu0
        %777 = vmatprep.subr.mxu0 0.0
        %v778 = vand.u32 %v309, 4294901760
        %v779 = vsub.f32 %v309, %v778
        %v780 = vand.u32 %v779, 4294901760
        %781 = vmatpush1.xpose.msra.mxu0 %v780
        %782 = vmatprep.subr.mxu0 0.0
        %v783 = vand.u32 %v306, 4294901760
        %v784 = vsub.f32 %v306, %v783
        %v785 = vand.u32 %v784, 4294901760
        %786 = vmatpush1.xpose.msra.mxu0 %v785
        %787 = vmatprep.subr.mxu0 0.0
        %v788 = vand.u32 %v303, 4294901760
        %v789 = vsub.f32 %v303, %v788
        %v790 = vand.u32 %v789, 4294901760
        %791 = vmatpush1.xpose.msra.mxu0 %v790
        %792 = vmatprep.subr.mxu0 0.0
        %v793 = vand.u32 %v300, 4294901760
        %v794 = vsub.f32 %v300, %v793
        %v795 = vand.u32 %v794, 4294901760
        %796 = vmatpush1.xpose.msra.mxu0 %v795
        %797 = vmatprep.subr.mxu0 0.0
        %v798 = vand.u32 %v297, 4294901760
        %v799 = vsub.f32 %v297, %v798
        %v800 = vand.u32 %v799, 4294901760
        %801 = vmatpush1.xpose.msra.mxu0 %v800
        %802 = vmatprep.subr.mxu0 0.0
        %v803 = vand.u32 %v294, 4294901760
        %v804 = vsub.f32 %v294, %v803
        %v805 = vand.u32 %v804, 4294901760
        %806 = vmatpush1.xpose.msra.mxu0 %v805
        %807 = vmatprep.subr.mxu0 0.0
        %v808 = vand.u32 %v291, 4294901760
        %v809 = vsub.f32 %v291, %v808
        %v810 = vand.u32 %v809, 4294901760
        %811 = vmatpush1.xpose.msra.mxu0 %v810
        %812 = vmatprep.subr.mxu0 0.0
        %v813 = vand.u32 %v288, 4294901760
        %v814 = vsub.f32 %v288, %v813
        %v815 = vand.u32 %v814, 4294901760
        %816 = vmatpush1.xpose.msra.mxu0 %v815
        %817 = vmatprep.subr.mxu0 0.0
        %v818 = vand.u32 %v285, 4294901760
        %v819 = vsub.f32 %v285, %v818
        %v820 = vand.u32 %v819, 4294901760
        %821 = vmatpush1.xpose.msra.mxu0 %v820
        %822 = vmatprep.subr.mxu0 0.0
        %v823 = vand.u32 %v282, 4294901760
        %v824 = vsub.f32 %v282, %v823
        %v825 = vand.u32 %v824, 4294901760
        %826 = vmatpush1.xpose.msra.mxu0 %v825
        %827 = vmatprep.subr.mxu0 0.0
        %v828 = vand.u32 %v279, 4294901760
        %v829 = vsub.f32 %v279, %v828
        %v830 = vand.u32 %v829, 4294901760
        %831 = vmatpush1.xpose.msra.mxu0 %v830
        %832 = vmatprep.subr.mxu0 0.0
        %v833 = vand.u32 %v276, 4294901760
        %v834 = vsub.f32 %v276, %v833
        %v835 = vand.u32 %v834, 4294901760
        %836 = vmatpush1.xpose.msra.mxu0 %v835
        %837 = vmatprep.subr.mxu0 0.0
        %v838 = vand.u32 %v273, 4294901760
        %v839 = vsub.f32 %v273, %v838
        %v840 = vand.u32 %v839, 4294901760
        %841 = vmatpush1.xpose.msra.mxu0 %v840
        %842 = vmatprep.subr.mxu0 0.0
        %v843 = vand.u32 %v270, 4294901760
        %v844 = vsub.f32 %v270, %v843
        %v845 = vand.u32 %v844, 4294901760
        %846 = vmatpush1.xpose.msra.mxu0 %v845
        %847 = vmatprep.subr.mxu0 0.0
        %v848 = vand.u32 %v267, 4294901760
        %v849 = vsub.f32 %v267, %v848
        %v850 = vand.u32 %v849, 4294901760
        %851 = vmatpush1.xpose.msra.mxu0 %v850
        %852 = vmatprep.subr.mxu0 0.0
        %v853 = vand.u32 %v264, 4294901760
        %v854 = vsub.f32 %v264, %v853
        %v855 = vand.u32 %v854, 4294901760
        %856 = vmatpush1.xpose.msra.mxu0 %v855
        %857 = vmatprep.subr.mxu0 0.0
        %858 = vmatpush2.xpose.msra.mxu0 0.0
        %859 = vmatprep.subr.mxu0 0.0
        %860 = vmatpush2.xpose.msra.mxu0 0.0
        %861 = vmatprep.subr.mxu0 0.0
        %862 = vmatpush2.xpose.msra.mxu0 0.0
        %863 = vmatprep.subr.mxu0 0.0
        %864 = vmatpush2.xpose.msra.mxu0 0.0
        %865 = vmatprep.subr.mxu0 0.0
        %866 = vmatpush2.xpose.msra.mxu0 0.0
        %867 = vmatprep.subr.mxu0 0.0
        %868 = vmatpush2.xpose.msra.mxu0 0.0
        %869 = vmatprep.subr.mxu0 0.0
        %870 = vmatpush2.xpose.msra.mxu0 0.0
        %871 = vmatprep.subr.mxu0 0.0
        %872 = vmatpush2.xpose.msra.mxu0 0.0
        %873 = vmatprep.subr.mxu0 0.0
        %874 = vmatpush2.xpose.msra.mxu0 0.0
        %875 = vmatprep.subr.mxu0 0.0
        %876 = vmatpush2.xpose.msra.mxu0 0.0
        %877 = vmatprep.subr.mxu0 0.0
        %878 = vmatpush2.xpose.msra.mxu0 0.0
        %879 = vmatprep.subr.mxu0 0.0
        %880 = vmatpush2.xpose.msra.mxu0 0.0
        %881 = vmatprep.subr.mxu0 0.0
        %882 = vmatpush2.xpose.msra.mxu0 0.0
        %883 = vmatprep.subr.mxu0 0.0
        %884 = vmatpush2.xpose.msra.mxu0 0.0
        %885 = vmatprep.subr.mxu0 0.0
        %886 = vmatpush2.xpose.msra.mxu0 0.0
        %887 = vmatprep.subr.mxu0 0.0
        %888 = vmatpush2.xpose.msra.mxu0 0.0
        %889 = vmatprep.mubr.f32.mxu0 0.0
        %v890 = vand.u32 %v258, 4294901760
        %891 = vmatmul.mubr.f32.gmra.mxu0 %v890
        %v892 = vpop.f32.mrf.mxu0
        %v893 = vadd.f32 %v766, %v892
        %v894 = vpop.f32.mrf.mxu0
        %895 = vmatprep.mubr.f32.mxu0 0.0
        %v896 = vand.u32 %v261, 4294901760
        %897 = vmatmul.mubr.f32.gmra.mxu0 %v896
        %v898 = vpop.f32.mrf.mxu0
        %v899 = vadd.f32 %v774, %v898
        %v900 = vpop.f32.mrf.mxu0
        %901 = vdwg.mxu0
        %902 = vmatprep.subr.mxu0 0.0
        %v903 = vand.u32 %v309, 4294901760
        %904 = vmatpush1.xpose.msra.mxu0 %v903
        %905 = vmatprep.subr.mxu0 0.0
        %v906 = vand.u32 %v306, 4294901760
        %907 = vmatpush1.xpose.msra.mxu0 %v906
        %908 = vmatprep.subr.mxu0 0.0
        %v909 = vand.u32 %v303, 4294901760
        %910 = vmatpush1.xpose.msra.mxu0 %v909
        %911 = vmatprep.subr.mxu0 0.0
        %v912 = vand.u32 %v300, 4294901760
        %913 = vmatpush1.xpose.msra.mxu0 %v912
        %914 = vmatprep.subr.mxu0 0.0
        %v915 = vand.u32 %v297, 4294901760
        %916 = vmatpush1.xpose.msra.mxu0 %v915
        %917 = vmatprep.subr.mxu0 0.0
        %v918 = vand.u32 %v294, 4294901760
        %919 = vmatpush1.xpose.msra.mxu0 %v918
        %920 = vmatprep.subr.mxu0 0.0
        %v921 = vand.u32 %v291, 4294901760
        %922 = vmatpush1.xpose.msra.mxu0 %v921
        %923 = vmatprep.subr.mxu0 0.0
        %v924 = vand.u32 %v288, 4294901760
        %925 = vmatpush1.xpose.msra.mxu0 %v924
        %926 = vmatprep.subr.mxu0 0.0
        %v927 = vand.u32 %v285, 4294901760
        %928 = vmatpush1.xpose.msra.mxu0 %v927
        %929 = vmatprep.subr.mxu0 0.0
        %v930 = vand.u32 %v282, 4294901760
        %931 = vmatpush1.xpose.msra.mxu0 %v930
        %932 = vmatprep.subr.mxu0 0.0
        %v933 = vand.u32 %v279, 4294901760
        %934 = vmatpush1.xpose.msra.mxu0 %v933
        %935 = vmatprep.subr.mxu0 0.0
        %v936 = vand.u32 %v276, 4294901760
        %937 = vmatpush1.xpose.msra.mxu0 %v936
        %938 = vmatprep.subr.mxu0 0.0
        %v939 = vand.u32 %v273, 4294901760
        %940 = vmatpush1.xpose.msra.mxu0 %v939
        %941 = vmatprep.subr.mxu0 0.0
        %v942 = vand.u32 %v270, 4294901760
        %943 = vmatpush1.xpose.msra.mxu0 %v942
        %944 = vmatprep.subr.mxu0 0.0
        %v945 = vand.u32 %v267, 4294901760
        %946 = vmatpush1.xpose.msra.mxu0 %v945
        %947 = vmatprep.subr.mxu0 0.0
        %v948 = vand.u32 %v264, 4294901760
        %949 = vmatpush1.xpose.msra.mxu0 %v948
        %950 = vmatprep.subr.mxu0 0.0
        %951 = vmatpush2.xpose.msra.mxu0 0.0
        %952 = vmatprep.subr.mxu0 0.0
        %953 = vmatpush2.xpose.msra.mxu0 0.0
        %954 = vmatprep.subr.mxu0 0.0
        %955 = vmatpush2.xpose.msra.mxu0 0.0
        %956 = vmatprep.subr.mxu0 0.0
        %957 = vmatpush2.xpose.msra.mxu0 0.0
        %958 = vmatprep.subr.mxu0 0.0
        %959 = vmatpush2.xpose.msra.mxu0 0.0
        %960 = vmatprep.subr.mxu0 0.0
        %961 = vmatpush2.xpose.msra.mxu0 0.0
        %962 = vmatprep.subr.mxu0 0.0
        %963 = vmatpush2.xpose.msra.mxu0 0.0
        %964 = vmatprep.subr.mxu0 0.0
        %965 = vmatpush2.xpose.msra.mxu0 0.0
        %966 = vmatprep.subr.mxu0 0.0
        %967 = vmatpush2.xpose.msra.mxu0 0.0
        %968 = vmatprep.subr.mxu0 0.0
        %969 = vmatpush2.xpose.msra.mxu0 0.0
        %970 = vmatprep.subr.mxu0 0.0
        %971 = vmatpush2.xpose.msra.mxu0 0.0
        %972 = vmatprep.subr.mxu0 0.0
        %973 = vmatpush2.xpose.msra.mxu0 0.0
        %974 = vmatprep.subr.mxu0 0.0
        %975 = vmatpush2.xpose.msra.mxu0 0.0
        %976 = vmatprep.subr.mxu0 0.0
        %977 = vmatpush2.xpose.msra.mxu0 0.0
        %978 = vmatprep.subr.mxu0 0.0
        %979 = vmatpush2.xpose.msra.mxu0 0.0
        %980 = vmatprep.subr.mxu0 0.0
        %981 = vmatpush2.xpose.msra.mxu0 0.0
        %982 = vmatprep.mubr.f32.mxu0 0.0
        %v983 = vand.u32 %v258, 4294901760
        %984 = vmatmul.mubr.f32.gmra.mxu0 %v983
        %v985 = vpop.f32.mrf.mxu0
        %v986 = vadd.f32 %v893, %v985
        %v987 = vpop.f32.mrf.mxu0
        %988 = vmatprep.mubr.f32.mxu0 0.0
        %v989 = vand.u32 %v261, 4294901760
        %990 = vmatmul.mubr.f32.gmra.mxu0 %v989
        %v991 = vpop.f32.mrf.mxu0
        %v992 = vadd.f32 %v899, %v991
        %v993 = vpop.f32.mrf.mxu0
        %994 = vdwg.mxu0
        %v995 = vmax.f32 %v986, 0.0
        %v996 = vmax.f32 %v992, 0.0
        %v997 = vld [vmem:[%s2] sm:$0x1f]
        %999 = vset.pattern.permute.xlu0 0
        %1000 = vperm.xlu0 %999, %v242
        %v1001 = vpop.permute.xlu0 %1000
        %vm1003 = vcmask 80896
        %v1005 = vsel %vm1003, %v997, 0
        %vm1007 = vcmask 1041408
        %v1009 = vsel %vm1007, %v996, 0
        %1011 = vmatprep.subr.mxu0 0.0
        %1012 = vmatpush1.msra.mxu0 0.0
        %1013 = vmatprep.subr.mxu0 0.0
        %1014 = vmatpush1.msra.mxu0 0.0
        %1015 = vmatprep.subr.mxu0 0.0
        %1016 = vmatpush1.msra.mxu0 0.0
        %1017 = vmatprep.subr.mxu0 0.0
        %1018 = vmatpush1.msra.mxu0 0.0
        %1019 = vmatprep.subr.mxu0 0.0
        %1020 = vmatpush1.msra.mxu0 0.0
        %1021 = vmatprep.subr.mxu0 0.0
        %1022 = vmatpush1.msra.mxu0 0.0
        %1023 = vmatprep.subr.mxu0 0.0
        %1024 = vmatpush1.msra.mxu0 0.0
        %1025 = vmatprep.subr.mxu0 0.0
        %1026 = vmatpush1.msra.mxu0 0.0
        %1027 = vmatprep.subr.mxu0 0.0
        %1028 = vmatpush1.msra.mxu0 0.0
        %1029 = vmatprep.subr.mxu0 0.0
        %1030 = vmatpush1.msra.mxu0 0.0
        %1031 = vmatprep.subr.mxu0 0.0
        %1032 = vmatpush1.msra.mxu0 0.0
        %1033 = vmatprep.subr.mxu0 0.0
        %1034 = vmatpush1.msra.mxu0 0.0
        %1035 = vmatprep.subr.mxu0 0.0
        %1036 = vmatpush1.msra.mxu0 0.0
        %1037 = vmatprep.subr.mxu0 0.0
        %1038 = vmatpush1.msra.mxu0 0.0
        %1039 = vmatprep.subr.mxu0 0.0
        %v1040 = vand.u32 %v1009, 4294901760
        %1041 = vmatpush1.msra.mxu0 %v1040
        %1042 = vmatprep.subr.mxu0 0.0
        %v1043 = vand.u32 %v995, 4294901760
        %1044 = vmatpush1.msra.mxu0 %v1043
        %1045 = vmatprep.subr.mxu0 0.0
        %1046 = vmatpush2.msra.mxu0 0.0
        %1047 = vmatprep.subr.mxu0 0.0
        %1048 = vmatpush2.msra.mxu0 0.0
        %1049 = vmatprep.subr.mxu0 0.0
        %1050 = vmatpush2.msra.mxu0 0.0
        %1051 = vmatprep.subr.mxu0 0.0
        %1052 = vmatpush2.msra.mxu0 0.0
        %1053 = vmatprep.subr.mxu0 0.0
        %1054 = vmatpush2.msra.mxu0 0.0
        %1055 = vmatprep.subr.mxu0 0.0
        %1056 = vmatpush2.msra.mxu0 0.0
        %1057 = vmatprep.subr.mxu0 0.0
        %1058 = vmatpush2.msra.mxu0 0.0
        %1059 = vmatprep.subr.mxu0 0.0
        %1060 = vmatpush2.msra.mxu0 0.0
        %1061 = vmatprep.subr.mxu0 0.0
        %1062 = vmatpush2.msra.mxu0 0.0
        %1063 = vmatprep.subr.mxu0 0.0
        %1064 = vmatpush2.msra.mxu0 0.0
        %1065 = vmatprep.subr.mxu0 0.0
        %1066 = vmatpush2.msra.mxu0 0.0
        %1067 = vmatprep.subr.mxu0 0.0
        %1068 = vmatpush2.msra.mxu0 0.0
        %1069 = vmatprep.subr.mxu0 0.0
        %1070 = vmatpush2.msra.mxu0 0.0
        %1071 = vmatprep.subr.mxu0 0.0
        %1072 = vmatpush2.msra.mxu0 0.0
        %1073 = vmatprep.subr.mxu0 0.0
        %1074 = vmatpush2.msra.mxu0 0.0
        %1075 = vmatprep.subr.mxu0 0.0
        %1076 = vmatpush2.msra.mxu0 0.0
        %1077 = vmatprep.mubr.f32.mxu0 0.0
        %v1078 = vand.u32 %v1005, 4294901760
        %v1079 = vsub.f32 %v1005, %v1078
        %v1080 = vand.u32 %v1079, 4294901760
        %v1081 = vsub.f32 %v1079, %v1080
        %v1082 = vand.u32 %v1081, 4294901760
        %1083 = vmatmul.mubr.f32.gmra.mxu0 %v1082
        %v1084 = vpop.f32.mrf.mxu0
        %v1085 = vadd.f32 %v1001, %v1084
        %v1086 = vpop.f32.mrf.mxu0
        %1087 = vdwg.mxu0
        %1088 = vmatprep.subr.mxu0 0.0
        %1089 = vmatpush1.msra.mxu0 0.0
        %1090 = vmatprep.subr.mxu0 0.0
        %1091 = vmatpush1.msra.mxu0 0.0
        %1092 = vmatprep.subr.mxu0 0.0
        %1093 = vmatpush1.msra.mxu0 0.0
        %1094 = vmatprep.subr.mxu0 0.0
        %1095 = vmatpush1.msra.mxu0 0.0
        %1096 = vmatprep.subr.mxu0 0.0
        %1097 = vmatpush1.msra.mxu0 0.0
        %1098 = vmatprep.subr.mxu0 0.0
        %1099 = vmatpush1.msra.mxu0 0.0
        %1100 = vmatprep.subr.mxu0 0.0
        %1101 = vmatpush1.msra.mxu0 0.0
        %1102 = vmatprep.subr.mxu0 0.0
        %1103 = vmatpush1.msra.mxu0 0.0
        %1104 = vmatprep.subr.mxu0 0.0
        %1105 = vmatpush1.msra.mxu0 0.0
        %1106 = vmatprep.subr.mxu0 0.0
        %1107 = vmatpush1.msra.mxu0 0.0
        %1108 = vmatprep.subr.mxu0 0.0
        %1109 = vmatpush1.msra.mxu0 0.0
        %1110 = vmatprep.subr.mxu0 0.0
        %1111 = vmatpush1.msra.mxu0 0.0
        %1112 = vmatprep.subr.mxu0 0.0
        %1113 = vmatpush1.msra.mxu0 0.0
        %1114 = vmatprep.subr.mxu0 0.0
        %1115 = vmatpush1.msra.mxu0 0.0
        %1116 = vmatprep.subr.mxu0 0.0
        %v1117 = vand.u32 %v1009, 4294901760
        %v1118 = vsub.f32 %v1009, %v1117
        %v1119 = vand.u32 %v1118, 4294901760
        %v1120 = vsub.f32 %v1118, %v1119
        %v1121 = vand.u32 %v1120, 4294901760
        %1122 = vmatpush1.msra.mxu0 %v1121
        %1123 = vmatprep.subr.mxu0 0.0
        %v1124 = vand.u32 %v995, 4294901760
        %v1125 = vsub.f32 %v995, %v1124
        %v1126 = vand.u32 %v1125, 4294901760
        %v1127 = vsub.f32 %v1125, %v1126
        %v1128 = vand.u32 %v1127, 4294901760
        %1129 = vmatpush1.msra.mxu0 %v1128
        %1130 = vmatprep.subr.mxu0 0.0
        %1131 = vmatpush2.msra.mxu0 0.0
        %1132 = vmatprep.subr.mxu0 0.0
        %1133 = vmatpush2.msra.mxu0 0.0
        %1134 = vmatprep.subr.mxu0 0.0
        %1135 = vmatpush2.msra.mxu0 0.0
        %1136 = vmatprep.subr.mxu0 0.0
        %1137 = vmatpush2.msra.mxu0 0.0
        %1138 = vmatprep.subr.mxu0 0.0
        %1139 = vmatpush2.msra.mxu0 0.0
        %1140 = vmatprep.subr.mxu0 0.0
        %1141 = vmatpush2.msra.mxu0 0.0
        %1142 = vmatprep.subr.mxu0 0.0
        %1143 = vmatpush2.msra.mxu0 0.0
        %1144 = vmatprep.subr.mxu0 0.0
        %1145 = vmatpush2.msra.mxu0 0.0
        %1146 = vmatprep.subr.mxu0 0.0
        %1147 = vmatpush2.msra.mxu0 0.0
        %1148 = vmatprep.subr.mxu0 0.0
        %1149 = vmatpush2.msra.mxu0 0.0
        %1150 = vmatprep.subr.mxu0 0.0
        %1151 = vmatpush2.msra.mxu0 0.0
        %1152 = vmatprep.subr.mxu0 0.0
        %1153 = vmatpush2.msra.mxu0 0.0
        %1154 = vmatprep.subr.mxu0 0.0
        %1155 = vmatpush2.msra.mxu0 0.0
        %1156 = vmatprep.subr.mxu0 0.0
        %1157 = vmatpush2.msra.mxu0 0.0
        %1158 = vmatprep.subr.mxu0 0.0
        %1159 = vmatpush2.msra.mxu0 0.0
        %1160 = vmatprep.subr.mxu0 0.0
        %1161 = vmatpush2.msra.mxu0 0.0
        %1162 = vmatprep.mubr.f32.mxu0 0.0
        %v1163 = vand.u32 %v1005, 4294901760
        %1164 = vmatmul.mubr.f32.gmra.mxu0 %v1163
        %v1165 = vpop.f32.mrf.mxu0
        %v1166 = vadd.f32 %v1085, %v1165
        %v1167 = vpop.f32.mrf.mxu0
        %1168 = vdwg.mxu0
        %1169 = vmatprep.subr.mxu0 0.0
        %1170 = vmatpush1.msra.mxu0 0.0
        %1171 = vmatprep.subr.mxu0 0.0
        %1172 = vmatpush1.msra.mxu0 0.0
        %1173 = vmatprep.subr.mxu0 0.0
        %1174 = vmatpush1.msra.mxu0 0.0
        %1175 = vmatprep.subr.mxu0 0.0
        %1176 = vmatpush1.msra.mxu0 0.0
        %1177 = vmatprep.subr.mxu0 0.0
        %1178 = vmatpush1.msra.mxu0 0.0
        %1179 = vmatprep.subr.mxu0 0.0
        %1180 = vmatpush1.msra.mxu0 0.0
        %1181 = vmatprep.subr.mxu0 0.0
        %1182 = vmatpush1.msra.mxu0 0.0
        %1183 = vmatprep.subr.mxu0 0.0
        %1184 = vmatpush1.msra.mxu0 0.0
        %1185 = vmatprep.subr.mxu0 0.0
        %1186 = vmatpush1.msra.mxu0 0.0
        %1187 = vmatprep.subr.mxu0 0.0
        %1188 = vmatpush1.msra.mxu0 0.0
        %1189 = vmatprep.subr.mxu0 0.0
        %1190 = vmatpush1.msra.mxu0 0.0
        %1191 = vmatprep.subr.mxu0 0.0
        %1192 = vmatpush1.msra.mxu0 0.0
        %1193 = vmatprep.subr.mxu0 0.0
        %1194 = vmatpush1.msra.mxu0 0.0
        %1195 = vmatprep.subr.mxu0 0.0
        %1196 = vmatpush1.msra.mxu0 0.0
        %1197 = vmatprep.subr.mxu0 0.0
        %v1198 = vand.u32 %v1009, 4294901760
        %v1199 = vsub.f32 %v1009, %v1198
        %1200 = vmatpush1.msra.mxu0 %v1199
        %1201 = vmatprep.subr.mxu0 0.0
        %v1202 = vand.u32 %v995, 4294901760
        %v1203 = vsub.f32 %v995, %v1202
        %1204 = vmatpush1.msra.mxu0 %v1203
        %1205 = vmatprep.subr.mxu0 0.0
        %1206 = vmatpush2.msra.mxu0 0.0
        %1207 = vmatprep.subr.mxu0 0.0
        %1208 = vmatpush2.msra.mxu0 0.0
        %1209 = vmatprep.subr.mxu0 0.0
        %1210 = vmatpush2.msra.mxu0 0.0
        %1211 = vmatprep.subr.mxu0 0.0
        %1212 = vmatpush2.msra.mxu0 0.0
        %1213 = vmatprep.subr.mxu0 0.0
        %1214 = vmatpush2.msra.mxu0 0.0
        %1215 = vmatprep.subr.mxu0 0.0
        %1216 = vmatpush2.msra.mxu0 0.0
        %1217 = vmatprep.subr.mxu0 0.0
        %1218 = vmatpush2.msra.mxu0 0.0
        %1219 = vmatprep.subr.mxu0 0.0
        %1220 = vmatpush2.msra.mxu0 0.0
        %1221 = vmatprep.subr.mxu0 0.0
        %1222 = vmatpush2.msra.mxu0 0.0
        %1223 = vmatprep.subr.mxu0 0.0
        %1224 = vmatpush2.msra.mxu0 0.0
        %1225 = vmatprep.subr.mxu0 0.0
        %1226 = vmatpush2.msra.mxu0 0.0
        %1227 = vmatprep.subr.mxu0 0.0
        %1228 = vmatpush2.msra.mxu0 0.0
        %1229 = vmatprep.subr.mxu0 0.0
        %1230 = vmatpush2.msra.mxu0 0.0
        %1231 = vmatprep.subr.mxu0 0.0
        %1232 = vmatpush2.msra.mxu0 0.0
        %1233 = vmatprep.subr.mxu0 0.0
        %1234 = vmatpush2.msra.mxu0 0.0
        %1235 = vmatprep.subr.mxu0 0.0
        %1236 = vmatpush2.msra.mxu0 0.0
        %1237 = vmatprep.mubr.f32.mxu0 0.0
        %v1238 = vand.u32 %v1005, 4294901760
        %v1239 = vsub.f32 %v1005, %v1238
        %1240 = vmatmul.mubr.f32.gmra.mxu0 %v1239
        %v1241 = vpop.f32.mrf.mxu0
        %v1242 = vadd.f32 %v1166, %v1241
        %v1243 = vpop.f32.mrf.mxu0
        %1244 = vdwg.mxu0
        %1245 = vmatprep.subr.mxu0 0.0
        %1246 = vmatpush1.msra.mxu0 0.0
        %1247 = vmatprep.subr.mxu0 0.0
        %1248 = vmatpush1.msra.mxu0 0.0
        %1249 = vmatprep.subr.mxu0 0.0
        %1250 = vmatpush1.msra.mxu0 0.0
        %1251 = vmatprep.subr.mxu0 0.0
        %1252 = vmatpush1.msra.mxu0 0.0
        %1253 = vmatprep.subr.mxu0 0.0
        %1254 = vmatpush1.msra.mxu0 0.0
        %1255 = vmatprep.subr.mxu0 0.0
        %1256 = vmatpush1.msra.mxu0 0.0
        %1257 = vmatprep.subr.mxu0 0.0
        %1258 = vmatpush1.msra.mxu0 0.0
        %1259 = vmatprep.subr.mxu0 0.0
        %1260 = vmatpush1.msra.mxu0 0.0
        %1261 = vmatprep.subr.mxu0 0.0
        %1262 = vmatpush1.msra.mxu0 0.0
        %1263 = vmatprep.subr.mxu0 0.0
        %1264 = vmatpush1.msra.mxu0 0.0
        %1265 = vmatprep.subr.mxu0 0.0
        %1266 = vmatpush1.msra.mxu0 0.0
        %1267 = vmatprep.subr.mxu0 0.0
        %1268 = vmatpush1.msra.mxu0 0.0
        %1269 = vmatprep.subr.mxu0 0.0
        %1270 = vmatpush1.msra.mxu0 0.0
        %1271 = vmatprep.subr.mxu0 0.0
        %1272 = vmatpush1.msra.mxu0 0.0
        %1273 = vmatprep.subr.mxu0 0.0
        %v1274 = vand.u32 %v1009, 4294901760
        %1275 = vmatpush1.msra.mxu0 %v1274
        %1276 = vmatprep.subr.mxu0 0.0
        %v1277 = vand.u32 %v995, 4294901760
        %1278 = vmatpush1.msra.mxu0 %v1277
        %1279 = vmatprep.subr.mxu0 0.0
        %1280 = vmatpush2.msra.mxu0 0.0
        %1281 = vmatprep.subr.mxu0 0.0
        %1282 = vmatpush2.msra.mxu0 0.0
        %1283 = vmatprep.subr.mxu0 0.0
        %1284 = vmatpush2.msra.mxu0 0.0
        %1285 = vmatprep.subr.mxu0 0.0
        %1286 = vmatpush2.msra.mxu0 0.0
        %1287 = vmatprep.subr.mxu0 0.0
        %1288 = vmatpush2.msra.mxu0 0.0
        %1289 = vmatprep.subr.mxu0 0.0
        %1290 = vmatpush2.msra.mxu0 0.0
        %1291 = vmatprep.subr.mxu0 0.0
        %1292 = vmatpush2.msra.mxu0 0.0
        %1293 = vmatprep.subr.mxu0 0.0
        %1294 = vmatpush2.msra.mxu0 0.0
        %1295 = vmatprep.subr.mxu0 0.0
        %1296 = vmatpush2.msra.mxu0 0.0
        %1297 = vmatprep.subr.mxu0 0.0
        %1298 = vmatpush2.msra.mxu0 0.0
        %1299 = vmatprep.subr.mxu0 0.0
        %1300 = vmatpush2.msra.mxu0 0.0
        %1301 = vmatprep.subr.mxu0 0.0
        %1302 = vmatpush2.msra.mxu0 0.0
        %1303 = vmatprep.subr.mxu0 0.0
        %1304 = vmatpush2.msra.mxu0 0.0
        %1305 = vmatprep.subr.mxu0 0.0
        %1306 = vmatpush2.msra.mxu0 0.0
        %1307 = vmatprep.subr.mxu0 0.0
        %1308 = vmatpush2.msra.mxu0 0.0
        %1309 = vmatprep.subr.mxu0 0.0
        %1310 = vmatpush2.msra.mxu0 0.0
        %1311 = vmatprep.mubr.f32.mxu0 0.0
        %v1312 = vand.u32 %v1005, 4294901760
        %v1313 = vsub.f32 %v1005, %v1312
        %v1314 = vand.u32 %v1313, 4294901760
        %1315 = vmatmul.mubr.f32.gmra.mxu0 %v1314
        %v1316 = vpop.f32.mrf.mxu0
        %v1317 = vadd.f32 %v1242, %v1316
        %v1318 = vpop.f32.mrf.mxu0
        %1319 = vdwg.mxu0
        %1320 = vmatprep.subr.mxu0 0.0
        %1321 = vmatpush1.msra.mxu0 0.0
        %1322 = vmatprep.subr.mxu0 0.0
        %1323 = vmatpush1.msra.mxu0 0.0
        %1324 = vmatprep.subr.mxu0 0.0
        %1325 = vmatpush1.msra.mxu0 0.0
        %1326 = vmatprep.subr.mxu0 0.0
        %1327 = vmatpush1.msra.mxu0 0.0
        %1328 = vmatprep.subr.mxu0 0.0
        %1329 = vmatpush1.msra.mxu0 0.0
        %1330 = vmatprep.subr.mxu0 0.0
        %1331 = vmatpush1.msra.mxu0 0.0
        %1332 = vmatprep.subr.mxu0 0.0
        %1333 = vmatpush1.msra.mxu0 0.0
        %1334 = vmatprep.subr.mxu0 0.0
        %1335 = vmatpush1.msra.mxu0 0.0
        %1336 = vmatprep.subr.mxu0 0.0
        %1337 = vmatpush1.msra.mxu0 0.0
        %1338 = vmatprep.subr.mxu0 0.0
        %1339 = vmatpush1.msra.mxu0 0.0
        %1340 = vmatprep.subr.mxu0 0.0
        %1341 = vmatpush1.msra.mxu0 0.0
        %1342 = vmatprep.subr.mxu0 0.0
        %1343 = vmatpush1.msra.mxu0 0.0
        %1344 = vmatprep.subr.mxu0 0.0
        %1345 = vmatpush1.msra.mxu0 0.0
        %1346 = vmatprep.subr.mxu0 0.0
        %1347 = vmatpush1.msra.mxu0 0.0
        %1348 = vmatprep.subr.mxu0 0.0
        %v1349 = vand.u32 %v1009, 4294901760
        %v1350 = vsub.f32 %v1009, %v1349
        %v1351 = vand.u32 %v1350, 4294901760
        %1352 = vmatpush1.msra.mxu0 %v1351
        %1353 = vmatprep.subr.mxu0 0.0
        %v1354 = vand.u32 %v995, 4294901760
        %v1355 = vsub.f32 %v995, %v1354
        %v1356 = vand.u32 %v1355, 4294901760
        %1357 = vmatpush1.msra.mxu0 %v1356
        %1358 = vmatprep.subr.mxu0 0.0
        %1359 = vmatpush2.msra.mxu0 0.0
        %1360 = vmatprep.subr.mxu0 0.0
        %1361 = vmatpush2.msra.mxu0 0.0
        %1362 = vmatprep.subr.mxu0 0.0
        %1363 = vmatpush2.msra.mxu0 0.0
        %1364 = vmatprep.subr.mxu0 0.0
        %1365 = vmatpush2.msra.mxu0 0.0
        %1366 = vmatprep.subr.mxu0 0.0
        %1367 = vmatpush2.msra.mxu0 0.0
        %1368 = vmatprep.subr.mxu0 0.0
        %1369 = vmatpush2.msra.mxu0 0.0
        %1370 = vmatprep.subr.mxu0 0.0
        %1371 = vmatpush2.msra.mxu0 0.0
        %1372 = vmatprep.subr.mxu0 0.0
        %1373 = vmatpush2.msra.mxu0 0.0
        %1374 = vmatprep.subr.mxu0 0.0
        %1375 = vmatpush2.msra.mxu0 0.0
        %1376 = vmatprep.subr.mxu0 0.0
        %1377 = vmatpush2.msra.mxu0 0.0
        %1378 = vmatprep.subr.mxu0 0.0
        %1379 = vmatpush2.msra.mxu0 0.0
        %1380 = vmatprep.subr.mxu0 0.0
        %1381 = vmatpush2.msra.mxu0 0.0
        %1382 = vmatprep.subr.mxu0 0.0
        %1383 = vmatpush2.msra.mxu0 0.0
        %1384 = vmatprep.subr.mxu0 0.0
        %1385 = vmatpush2.msra.mxu0 0.0
        %1386 = vmatprep.subr.mxu0 0.0
        %1387 = vmatpush2.msra.mxu0 0.0
        %1388 = vmatprep.subr.mxu0 0.0
        %1389 = vmatpush2.msra.mxu0 0.0
        %1390 = vmatprep.mubr.f32.mxu0 0.0
        %v1391 = vand.u32 %v1005, 4294901760
        %1392 = vmatmul.mubr.f32.gmra.mxu0 %v1391
        %v1393 = vpop.f32.mrf.mxu0
        %v1394 = vadd.f32 %v1317, %v1393
        %v1395 = vpop.f32.mrf.mxu0
        %1396 = vdwg.mxu0
        %1397 = vmatprep.subr.mxu0 0.0
        %1398 = vmatpush1.msra.mxu0 0.0
        %1399 = vmatprep.subr.mxu0 0.0
        %1400 = vmatpush1.msra.mxu0 0.0
        %1401 = vmatprep.subr.mxu0 0.0
        %1402 = vmatpush1.msra.mxu0 0.0
        %1403 = vmatprep.subr.mxu0 0.0
        %1404 = vmatpush1.msra.mxu0 0.0
        %1405 = vmatprep.subr.mxu0 0.0
        %1406 = vmatpush1.msra.mxu0 0.0
        %1407 = vmatprep.subr.mxu0 0.0
        %1408 = vmatpush1.msra.mxu0 0.0
        %1409 = vmatprep.subr.mxu0 0.0
        %1410 = vmatpush1.msra.mxu0 0.0
        %1411 = vmatprep.subr.mxu0 0.0
        %1412 = vmatpush1.msra.mxu0 0.0
        %1413 = vmatprep.subr.mxu0 0.0
        %1414 = vmatpush1.msra.mxu0 0.0
        %1415 = vmatprep.subr.mxu0 0.0
        %1416 = vmatpush1.msra.mxu0 0.0
        %1417 = vmatprep.subr.mxu0 0.0
        %1418 = vmatpush1.msra.mxu0 0.0
        %1419 = vmatprep.subr.mxu0 0.0
        %1420 = vmatpush1.msra.mxu0 0.0
        %1421 = vmatprep.subr.mxu0 0.0
        %1422 = vmatpush1.msra.mxu0 0.0
        %1423 = vmatprep.subr.mxu0 0.0
        %1424 = vmatpush1.msra.mxu0 0.0
        %1425 = vmatprep.subr.mxu0 0.0
        %v1426 = vand.u32 %v1009, 4294901760
        %1427 = vmatpush1.msra.mxu0 %v1426
        %1428 = vmatprep.subr.mxu0 0.0
        %v1429 = vand.u32 %v995, 4294901760
        %1430 = vmatpush1.msra.mxu0 %v1429
        %1431 = vmatprep.subr.mxu0 0.0
        %1432 = vmatpush2.msra.mxu0 0.0
        %1433 = vmatprep.subr.mxu0 0.0
        %1434 = vmatpush2.msra.mxu0 0.0
        %1435 = vmatprep.subr.mxu0 0.0
        %1436 = vmatpush2.msra.mxu0 0.0
        %1437 = vmatprep.subr.mxu0 0.0
        %1438 = vmatpush2.msra.mxu0 0.0
        %1439 = vmatprep.subr.mxu0 0.0
        %1440 = vmatpush2.msra.mxu0 0.0
        %1441 = vmatprep.subr.mxu0 0.0
        %1442 = vmatpush2.msra.mxu0 0.0
        %1443 = vmatprep.subr.mxu0 0.0
        %1444 = vmatpush2.msra.mxu0 0.0
        %1445 = vmatprep.subr.mxu0 0.0
        %1446 = vmatpush2.msra.mxu0 0.0
        %1447 = vmatprep.subr.mxu0 0.0
        %1448 = vmatpush2.msra.mxu0 0.0
        %1449 = vmatprep.subr.mxu0 0.0
        %1450 = vmatpush2.msra.mxu0 0.0
        %1451 = vmatprep.subr.mxu0 0.0
        %1452 = vmatpush2.msra.mxu0 0.0
        %1453 = vmatprep.subr.mxu0 0.0
        %1454 = vmatpush2.msra.mxu0 0.0
        %1455 = vmatprep.subr.mxu0 0.0
        %1456 = vmatpush2.msra.mxu0 0.0
        %1457 = vmatprep.subr.mxu0 0.0
        %1458 = vmatpush2.msra.mxu0 0.0
        %1459 = vmatprep.subr.mxu0 0.0
        %1460 = vmatpush2.msra.mxu0 0.0
        %1461 = vmatprep.subr.mxu0 0.0
        %1462 = vmatpush2.msra.mxu0 0.0
        %1463 = vmatprep.mubr.f32.mxu0 0.0
        %v1464 = vand.u32 %v1005, 4294901760
        %1465 = vmatmul.mubr.f32.gmra.mxu0 %v1464
        %v1466 = vpop.f32.mrf.mxu0
        %v1467 = vadd.f32 %v1394, %v1466
        %v1468 = vpop.f32.mrf.mxu0
        %1469 = vdwg.mxu0
        %v1470 = vmax.f32 %v1467, 0.0
        %v1471 = vld [vmem:[%s3] sm:$0x1f]
        %1473 = vset.pattern.permute.xlu0 0
        %1474 = vperm.xlu0 %1473, %v1471
        %v1475 = vpop.permute.xlu0 %1474
        %v1477 = vmul.f32 %v1475, %v1470
        %vm1478 = vcmask 1044480
        %v1479 = vsel %vm1478, %v1477, 0.0
        %v1480 = vrot.slane %v1479, 4
        %v1481 = vadd.f32 %v1479, %v1480
        %v1482 = vrot.slane %v1481, 2
        %v1483 = vadd.f32 %v1481, %v1482
        %v1484 = vrot.slane %v1483, 1
        %v1485 = vadd.f32 %v1483, %v1484
        %1487 = vset.pattern.permute.xlu0 0
        %1488 = vperm.xlu0 %1487, %v243
        %v1489 = vpop.permute.xlu0 %1488
        %v1491 = vadd.f32 %v1485, %v1489
        %v1492 = vxor.u32 %v1491, 2147483648
        %v1493 = vmul.f32 %v1492, 1.442695
        %v1494 = vpow.pop %v1493
        %v1495 = vadd.f32 %v1494, 1.0
        %v1496 = vrcp.pop %v1495
        %v1497 = vmul.f32 1.0, %v1496
        %1498 = vst [vmem:[%s217] sm:$0x1] %v1497
        %s1499 = sand.u32 %s137, 1
        %s1500 = scalar_lea.sflag [#allocation3], %s1499
        %s1501 = sand.u32 %s137, 1
        %s1502 = scalar_lea.vmem [#allocation2], %s1501
        // Predicated region
        $region41: #{tpu_custom_call.1} parent=39 // pred_check
          %p1503 = pneg %p147
        $region42: #{tpu_custom_call.1} parent=39 // pred_check_branch
          %1505 = sbr.rel (%p1503) target = $region44
        $region43: #{tpu_custom_call.1} parent=39 // pred_region
          %s1507 = ssub.s32 16, 16
          %1508 = vsyncadd %s1500, %s1507
          %s1509 = smul.addr %s19, 16
          %s1510 = scalar_lea.hbm %s5, %s1509
          %s1512 = sshll.u32 %s1502, 4
          %s1513 = int_to_ptr.vmem [resolvable:$true] %s1512
          %1515 = dma.vmem_to_hbm [thread:$0]  %s1513, 16, %s1510, %s1500
        $region44: #{tpu_custom_call.1} parent=39 // pred_fallthru
          _
      $region40: #{tpu_custom_call.1} parent=5 // pred_fallthru
        _
      %p1516 = scmp.le.s32.totalorder 2, %s14
      // Predicated region
      $region45: #{tpu_custom_call.1} parent=5 // pred_check
        %p1517 = pneg %p1516
      $region46: #{tpu_custom_call.1} parent=5 // pred_check_branch
        %1519 = sbr.rel (%p1517) target = $region48
      $region47: #{tpu_custom_call.1} parent=5 // pred_region
        %s1520 = ssub.s32 %s14, 2
        // Predicated region
        $region49: #{tpu_custom_call.1} parent=47 // pred_check
          %p1521 = pneg %p153
        $region50: #{tpu_custom_call.1} parent=47 // pred_check_branch
          %1523 = sbr.rel (%p1521) target = $region52
        $region51: #{tpu_custom_call.1} parent=47 // pred_region
          %s1524 = sand.u32 %s138, 1
          %s1525 = scalar_lea.sflag [#allocation3], %s1524
          %s1526 = sand.u32 %s138, 1
          %s1527 = scalar_lea.vmem [#allocation2], %s1526
          %1528 = dma.done %s1525, 16
        $region52: #{tpu_custom_call.1} parent=47 // pred_fallthru
          _
      $region48: #{tpu_custom_call.1} parent=5 // pred_fallthru
        _
    $region6: #{tpu_custom_call.1} parent=1 // loop_footer
      %s18 = sadd.s32 1, %s14
    $region7: #{tpu_custom_call.1} parent=1 // loop_footer_branch
      %13 = sbr.rel target = $region3
    $region8: #{tpu_custom_call.1} parent=1 // loop_exit
      _
    %1529 = vsyncpa [#allocation3], 1
    %s1530 = scalar_lea.sflag [#allocation3], 1
    %1531 = vsyncpa %s1530, 1

</llo_original>
